<compile_context>
chip_gen: v6e
topology: v6e:2x2x1
jax: 0.10.0
libtpu: 0.0.40
codegen_flags: <defaults>
</compile_context>

<pallas_src>
import jax
import jax.numpy as jnp
from jax import lax
from jax.experimental import pallas as pl
from jax.experimental.pallas import tpu as pltpu


def aff_kernel(x_ref, wb_ref, g_ref, gt_ref, gamma_ref, beta_ref,
               w1_ref, a2_ref, w4t_ref, w2_ref, w3_ref,
               out_ref, xph_ref):
    B, H, WC = x_ref.shape
    C = g_ref.shape[1]
    W = WC // C
    n = B * H * W

    x = x_ref[...]                                   # (B, H, W*C), lane-dense

    # ---- 'same' padding along H handled in-kernel (halo rows in VMEM scratch)
    xph_ref[...] = jnp.zeros(xph_ref.shape, xph_ref.dtype)
    xph_ref[:, 1:H + 1, :] = x
    xph = xph_ref[...]                               # (B, H+2, W*C)

    # ---- conv5 (3x3, pad=1, no bias) as ONE banded MXU matmul:
    #      lhs (B*H, 3*W*C) @ wb (3*W*C, W*C). The three kh slabs are stacked
    #      along K (aligned 256-lane concat); kw taps + W halo live in wb.
    lhs = jnp.concatenate(
        [xph[:, 0:H, :], xph[:, 1:H + 1, :], xph[:, 2:H + 2, :]], axis=-1)
    lhs = lhs.reshape(B * H, 3 * WC)
    acc = jnp.dot(lhs, wb_ref[...], preferred_element_type=jnp.float32)

    # ---- bn1 (module is in training mode -> batch stats, biased variance),
    #      fused single pass: sums -> per-channel via gather matmul (g), then
    #      folded scale/bias re-expanded to the lane-dense layout (gt).
    sum_wc = jnp.sum(acc, axis=0, keepdims=True)                    # (1, W*C)
    sq_wc = jnp.sum(acc * acc, axis=0, keepdims=True)               # (1, W*C)
    sum_c = jnp.dot(sum_wc, g_ref[...], preferred_element_type=jnp.float32)
    sq_c = jnp.dot(sq_wc, g_ref[...], preferred_element_type=jnp.float32)
    mean_c = sum_c * (1.0 / n)
    var_c = sq_c * (1.0 / n) - mean_c * mean_c
    scale_c = gamma_ref[...] * lax.rsqrt(var_c + 1e-5)              # (1, C)
    bias_c = beta_ref[...] - mean_c * scale_c                       # (1, C)
    scale_wc = jnp.dot(scale_c, gt_ref[...], preferred_element_type=jnp.float32)
    bias_wc = jnp.dot(bias_c, gt_ref[...], preferred_element_type=jnp.float32)
    z = jax.nn.sigmoid(acc * scale_wc + bias_wc)                    # (B*H, W*C)

    # ---- channel-attention (y) branch: tiny and latency-bound, kept off the
    #      MXU (VPU broadcast-multiply + reduce); conv2/conv3 are SMEM scalars.
    p_wc = jnp.sum(x, axis=1)                                       # (B, W*C)
    p_c = jnp.dot(p_wc, g_ref[...],
                  preferred_element_type=jnp.float32) * (1.0 / (H * W))   # (B, C)
    v = jnp.sum(p_c[:, None, :] * w1_ref[...][None, :, :], axis=-1)       # (B, hide)
    logits = v * w2_ref[0]                                          # conv2 (scalar)
    logits = logits - jnp.max(logits, axis=-1, keepdims=True)
    e = jnp.exp(logits)
    a1 = e / jnp.sum(e, axis=-1, keepdims=True)                     # softmax(dim=2)
    y = v * a1 + jnp.sum(v[:, :, None] * a2_ref[...][None, :, :], axis=1)  # eye*A1 + A2
    y = jnp.maximum(y * w3_ref[0], 0.0)                             # conv3 (scalar) + relu
    att_c = jax.nn.sigmoid(
        jnp.sum(y[:, :, None] * w4t_ref[...][None, :, :], axis=1))         # (B, C)
    att_wc = jnp.dot(att_c, gt_ref[...], preferred_element_type=jnp.float32)  # (B, W*C)

    # ---- out = x * y * z, stored lane-dense as (B, H, W*C)
    out_ref[...] = x * att_wc[:, None, :] * z.reshape(B, H, WC)


@jax.jit
def aff_forward(x_nchw, w5, gamma, beta, w1, w2, w3, w4, A2):
    """x_nchw: (B, C, H, W) float32 (PyTorch layout). Returns (B, C, H, W)."""
    B, C, H, W = x_nchw.shape
    hide = w1.shape[0]
    WC = W * C

    # NHWC flattened lane-dense (W*C on the lane axis); reshape is contiguous.
    x_flat = jnp.transpose(x_nchw, (0, 2, 3, 1)).reshape(B, H, WC)

    # conv5 as a banded matmul weight:
    #   wb[kh*W*C + w_in*C + ci, w_out*C + co] = w5[co, ci, kh, kw]
    # with w_in = w_out + kw - 1 (zero outside the band -> 'same' W padding).
    w5t = jnp.transpose(w5, (2, 3, 1, 0))                    # (3, 3, Cin, Cout)
    w_in = jnp.arange(W)[:, None, None]
    w_out = jnp.arange(W)[None, :, None]
    kw = jnp.arange(3)[None, None, :]
    sel = (w_in == w_out + kw - 1).astype(jnp.float32)       # (W, W, 3)
    wb = jnp.einsum('pqd,hdio->hpiqo', sel, w5t).reshape(3 * WC, WC)

    # channel gather / scatter helpers for the (W*C)-flattened layout
    g = jnp.tile(jnp.eye(C, dtype=jnp.float32), (W, 1))      # (W*C, C)
    gt = g.T                                                 # (C, W*C)

    w1hc = w1[:, :, 0, 0].astype(jnp.float32)                # (hide, C)
    w4t = w4[:, :, 0, 0].T.astype(jnp.float32)               # (hide, C)
    gamma2 = gamma.reshape(1, C).astype(jnp.float32)
    beta2 = beta.reshape(1, C).astype(jnp.float32)
    w2s = w2.reshape(1).astype(jnp.float32)                  # conv2 scalar (SMEM)
    w3s = w3.reshape(1).astype(jnp.float32)                  # conv3 scalar (SMEM)

    flops = 2 * (B * H) * (3 * WC) * WC + 16 * B * H * WC
    transcendentals = B * H * WC + 2 * B * C + 2 * B * hide
    bytes_accessed = 4 * (2 * B * H * WC + 3 * WC * WC + 2 * WC * C + 4 * C
                          + 2 * hide * C + hide * hide + 2)

    out_flat = pl.pallas_call(
        aff_kernel,
        out_shape=jax.ShapeDtypeStruct((B, H, WC), jnp.float32),
        grid=(1,),
        in_specs=[
            pl.BlockSpec((B, H, WC), lambda i: (0, 0, 0)),        # x (lane-dense)
            pl.BlockSpec((3 * WC, WC), lambda i: (0, 0)),         # banded conv5 weight
            pl.BlockSpec((WC, C), lambda i: (0, 0)),              # channel gather
            pl.BlockSpec((C, WC), lambda i: (0, 0)),              # channel scatter
            pl.BlockSpec((1, C), lambda i: (0, 0)),               # bn gamma
            pl.BlockSpec((1, C), lambda i: (0, 0)),               # bn beta
            pl.BlockSpec((hide, C), lambda i: (0, 0)),            # conv1 weight
            pl.BlockSpec((hide, hide), lambda i: (0, 0)),         # A2
            pl.BlockSpec((hide, C), lambda i: (0, 0)),            # conv4^T
            pl.BlockSpec(memory_space=pltpu.MemorySpace.SMEM),    # conv2 scalar
            pl.BlockSpec(memory_space=pltpu.MemorySpace.SMEM),    # conv3 scalar
        ],
        out_specs=pl.BlockSpec((B, H, WC), lambda i: (0, 0, 0)),
        scratch_shapes=[pltpu.VMEM((B, H + 2, WC), jnp.float32)],  # H-halo pad
        compiler_params=pltpu.CompilerParams(
            dimension_semantics=("arbitrary",)),
        cost_estimate=pl.CostEstimate(
            flops=flops, transcendentals=transcendentals,
            bytes_accessed=bytes_accessed),
    )(x_flat, wb, g, gt, gamma2, beta2, w1hc, A2, w4t, w2s, w3s)

    out = out_flat.reshape(B, H, W, C)
    return jnp.transpose(out, (0, 3, 1, 2))                  # back to NCHW


def aff_reference(x, w5, gamma, beta, w1, w2, w3, w4, A2):
    """Pure-JAX reference mirroring the PyTorch forward (NCHW)."""
    B, C, H, W = x.shape
    hide = w1.shape[0]
    z = lax.conv_general_dilated(x, w5, (1, 1), ((1, 1), (1, 1)),
                                 dimension_numbers=("NCHW", "OIHW", "NCHW"))
    mean = jnp.mean(z, axis=(0, 2, 3), keepdims=True)
    var = jnp.mean((z - mean) ** 2, axis=(0, 2, 3), keepdims=True)
    z = (z - mean) / jnp.sqrt(var + 1e-5) * gamma.reshape(1, C, 1, 1) \
        + beta.reshape(1, C, 1, 1)
    z = jax.nn.sigmoid(z)
    p = jnp.mean(x, axis=(2, 3))                             # (B, C)
    v = p @ w1[:, :, 0, 0].T                                 # (B, hide)
    a1 = jax.nn.softmax(v * w2[0, 0, 0], axis=-1)
    A = jnp.eye(hide, dtype=jnp.float32)[None] * a1[:, None, :] + A2[None]
    y = jnp.einsum("bj,bjk->bk", v, A)
    y = jax.nn.relu(y * w3[0, 0, 0])
    att = jax.nn.sigmoid(y @ w4[:, :, 0, 0].T)               # (B, C)
    return x * att[:, :, None, None] * z


if __name__ == "__main__":
    B, C, H, W, ratio = 2, 16, 16, 16, 4
    hide = C // ratio

    key = jax.random.PRNGKey(0)
    ks = jax.random.split(key, 6)
    x = jax.random.normal(ks[0], (B, C, H, W), jnp.float32)

    # deterministic synthetic parameters (shapes from AFF.__init__)
    w5 = jax.random.normal(ks[1], (C, C, 3, 3), jnp.float32) * 0.1     # conv5
    w1 = jax.random.normal(ks[2], (hide, C, 1, 1), jnp.float32) * 0.3  # conv1
    w2 = jax.random.normal(ks[3], (1, 1, 1), jnp.float32)              # conv2
    w3 = jax.random.normal(ks[4], (1, 1, 1), jnp.float32)              # conv3
    w4 = jax.random.normal(ks[5], (C, hide, 1, 1), jnp.float32) * 0.3  # conv4
    A2 = jnp.full((hide, hide), 1e-6, jnp.float32)                     # self.A2
    gamma = jnp.ones((C,), jnp.float32)                                # bn1 weight
    beta = jnp.zeros((C,), jnp.float32)                                # bn1 bias

    out = aff_forward(x, w5, gamma, beta, w1, w2, w3, w4, A2)
    out = jax.block_until_ready(out)

    ref = aff_reference(x, w5, gamma, beta, w1, w2, w3, w4, A2)
    assert out.shape == ref.shape, (out.shape, ref.shape)
    max_err = float(jnp.max(jnp.abs(out - ref)))
    assert jnp.allclose(out, ref, rtol=2e-3, atol=2e-3), f"max_err={max_err}"
    print("KERNEL_OK")
</pallas_src>

<mosaic_0001>
module attributes {stable_mosaic.version = 11 : i64} {
  func.func @aff_kernel(%arg0: i32, %arg1: memref<2x16x256xf32, #tpu.memory_space<vmem>>, %arg2: memref<768x256xf32, #tpu.memory_space<vmem>>, %arg3: memref<256x16xf32, #tpu.memory_space<vmem>>, %arg4: memref<16x256xf32, #tpu.memory_space<vmem>>, %arg5: memref<1x16xf32, #tpu.memory_space<vmem>>, %arg6: memref<1x16xf32, #tpu.memory_space<vmem>>, %arg7: memref<4x16xf32, #tpu.memory_space<vmem>>, %arg8: memref<4x4xf32, #tpu.memory_space<vmem>>, %arg9: memref<4x16xf32, #tpu.memory_space<vmem>>, %arg10: memref<1xf32, #tpu.memory_space<smem>>, %arg11: memref<1xf32, #tpu.memory_space<smem>>, %arg12: memref<2x16x256xf32, #tpu.memory_space<vmem>>, %arg13: memref<2x18x256xf32, #tpu.memory_space<vmem>>) attributes {dimension_semantics = [#tpu.dimension_semantics<arbitrary>], iteration_bounds = array<i64: 1>, scalar_prefetch = 0 : i64, scratch_operands = 1 : i64, tpu.core_type = #tpu.core_type<tc>, window_params = [{pipeline_mode = #tpu.pipeline_mode<synchronous>, transform_indices = @transform_0, window_bounds = array<i64: 2, 16, 256>}, {pipeline_mode = #tpu.pipeline_mode<synchronous>, transform_indices = @transform_1, window_bounds = array<i64: 768, 256>}, {pipeline_mode = #tpu.pipeline_mode<synchronous>, transform_indices = @transform_2, window_bounds = array<i64: 256, 16>}, {pipeline_mode = #tpu.pipeline_mode<synchronous>, transform_indices = @transform_3, window_bounds = array<i64: 16, 256>}, {pipeline_mode = #tpu.pipeline_mode<synchronous>, transform_indices = @transform_4, window_bounds = array<i64: 1, 16>}, {pipeline_mode = #tpu.pipeline_mode<synchronous>, transform_indices = @transform_5, window_bounds = array<i64: 1, 16>}, {pipeline_mode = #tpu.pipeline_mode<synchronous>, transform_indices = @transform_6, window_bounds = array<i64: 4, 16>}, {pipeline_mode = #tpu.pipeline_mode<synchronous>, transform_indices = @transform_7, window_bounds = array<i64: 4, 4>}, {pipeline_mode = #tpu.pipeline_mode<synchronous>, transform_indices = @transform_8, window_bounds = array<i64: 4, 16>}, {transform_indices = @transform_9, window_bounds = array<i64: 1>}, {transform_indices = @transform_10, window_bounds = array<i64: 1>}, {pipeline_mode = #tpu.pipeline_mode<synchronous>, transform_indices = @transform_11, window_bounds = array<i64: 2, 16, 256>}]} {
    %c0 = arith.constant 0 : index
    %c0_0 = arith.constant 0 : index
    %c0_1 = arith.constant 0 : index
    %0 = vector.load %arg1[%c0, %c0_0, %c0_1] : memref<2x16x256xf32, #tpu.memory_space<vmem>>, vector<2x16x256xf32>
    %cst = arith.constant 0.000000e+00 : f32
    %1 = vector.broadcast %cst : f32 to vector<2x18x256xf32>
    %c0_2 = arith.constant 0 : index
    %c0_3 = arith.constant 0 : index
    %c0_4 = arith.constant 0 : index
    %2 = vector.load %arg13[%c0_2, %c0_3, %c0_4] : memref<2x18x256xf32, #tpu.memory_space<vmem>>, vector<2x18x256xf32>
    tpu.vector_store %arg13[%c0_2, %c0_3, %c0_4], %1 {strides = array<i32>} : memref<2x18x256xf32, #tpu.memory_space<vmem>>, vector<2x18x256xf32>,
    %c0_5 = arith.constant 0 : index
    %c1 = arith.constant 1 : index
    %c0_6 = arith.constant 0 : index
    %3 = vector.load %arg13[%c0_5, %c1, %c0_6] : memref<2x18x256xf32, #tpu.memory_space<vmem>>, vector<2x16x256xf32>
    tpu.vector_store %arg13[%c0_5, %c1, %c0_6], %0 {strides = array<i32>} : memref<2x18x256xf32, #tpu.memory_space<vmem>>, vector<2x16x256xf32>,
    %c0_7 = arith.constant 0 : index
    %c0_8 = arith.constant 0 : index
    %c0_9 = arith.constant 0 : index
    %4 = vector.load %arg13[%c0_7, %c0_8, %c0_9] : memref<2x18x256xf32, #tpu.memory_space<vmem>>, vector<2x18x256xf32>
    %5 = vector.extract_strided_slice %4 {offsets = [0, 0, 0], sizes = [2, 16, 256], strides = [1, 1, 1]} : vector<2x18x256xf32> to vector<2x16x256xf32>
    %6 = vector.extract_strided_slice %4 {offsets = [0, 1, 0], sizes = [2, 16, 256], strides = [1, 1, 1]} : vector<2x18x256xf32> to vector<2x16x256xf32>
    %7 = vector.extract_strided_slice %4 {offsets = [0, 2, 0], sizes = [2, 16, 256], strides = [1, 1, 1]} : vector<2x18x256xf32> to vector<2x16x256xf32>
    %8 = tpu.concatenate %5, %6, %7 in 2 : vector<2x16x256xf32>, vector<2x16x256xf32>, vector<2x16x256xf32> -> vector<2x16x768xf32>
    %9 = vector.shape_cast %8 : vector<2x16x768xf32> to vector<32x768xf32>
    %c0_10 = arith.constant 0 : index
    %c0_11 = arith.constant 0 : index
    %10 = vector.load %arg2[%c0_10, %c0_11] : memref<768x256xf32, #tpu.memory_space<vmem>>, vector<768x256xf32>
    %cst_12 = arith.constant dense<0.000000e+00> : vector<32x256xf32>
    %11 = tpu.matmul %9, %10, %cst_12 {dimension_numbers = #tpu.dot_dimension_numbers<[1], [0], [0], [1], [0, 0, 1, 1], [], []>} : vector<32x768xf32>, vector<768x256xf32>, vector<32x256xf32> -> vector<32x256xf32>
    %cst_13 = arith.constant dense<0.000000e+00> : vector<256xf32>
    %12 = vector.multi_reduction <add>, %11, %cst_13 [0] : vector<32x256xf32> to vector<256xf32>
    %13 = vector.shape_cast %12 : vector<256xf32> to vector<1x256xf32>
    %14 = arith.mulf %11, %11 : vector<32x256xf32>
    %cst_14 = arith.constant dense<0.000000e+00> : vector<256xf32>
    %15 = vector.multi_reduction <add>, %14, %cst_14 [0] : vector<32x256xf32> to vector<256xf32>
    %16 = vector.shape_cast %15 : vector<256xf32> to vector<1x256xf32>
    %c0_15 = arith.constant 0 : index
    %c0_16 = arith.constant 0 : index
    %17 = vector.load %arg3[%c0_15, %c0_16] : memref<256x16xf32, #tpu.memory_space<vmem>>, vector<256x16xf32>
    %cst_17 = arith.constant dense<0.000000e+00> : vector<1x16xf32>
    %18 = tpu.matmul %13, %17, %cst_17 {dimension_numbers = #tpu.dot_dimension_numbers<[1], [0], [0], [1], [0, 0, 1, 1], [], []>} : vector<1x256xf32>, vector<256x16xf32>, vector<1x16xf32> -> vector<1x16xf32>
    %c0_18 = arith.constant 0 : index
    %c0_19 = arith.constant 0 : index
    %19 = vector.load %arg3[%c0_18, %c0_19] : memref<256x16xf32, #tpu.memory_space<vmem>>, vector<256x16xf32>
    %cst_20 = arith.constant dense<0.000000e+00> : vector<1x16xf32>
    %20 = tpu.matmul %16, %19, %cst_20 {dimension_numbers = #tpu.dot_dimension_numbers<[1], [0], [0], [1], [0, 0, 1, 1], [], []>} : vector<1x256xf32>, vector<256x16xf32>, vector<1x16xf32> -> vector<1x16xf32>
    %cst_21 = arith.constant 0.001953125 : f32
    %21 = vector.broadcast %cst_21 : f32 to vector<1x16xf32>
    %22 = arith.mulf %18, %21 : vector<1x16xf32>
    %cst_22 = arith.constant 0.001953125 : f32
    %23 = vector.broadcast %cst_22 : f32 to vector<1x16xf32>
    %24 = arith.mulf %20, %23 : vector<1x16xf32>
    %25 = arith.mulf %22, %22 : vector<1x16xf32>
    %26 = arith.subf %24, %25 : vector<1x16xf32>
    %c0_23 = arith.constant 0 : index
    %c0_24 = arith.constant 0 : index
    %27 = vector.load %arg5[%c0_23, %c0_24] : memref<1x16xf32, #tpu.memory_space<vmem>>, vector<1x16xf32>
    %cst_25 = arith.constant 9.99999974E-6 : f32
    %28 = vector.broadcast %cst_25 : f32 to vector<1x16xf32>
    %29 = arith.addf %26, %28 : vector<1x16xf32>
    %30 = math.rsqrt %29 : vector<1x16xf32>
    %31 = arith.mulf %27, %30 : vector<1x16xf32>
    %c0_26 = arith.constant 0 : index
    %c0_27 = arith.constant 0 : index
    %32 = vector.load %arg6[%c0_26, %c0_27] : memref<1x16xf32, #tpu.memory_space<vmem>>, vector<1x16xf32>
    %33 = arith.mulf %22, %31 : vector<1x16xf32>
    %34 = arith.subf %32, %33 : vector<1x16xf32>
    %c0_28 = arith.constant 0 : index
    %c0_29 = arith.constant 0 : index
    %35 = vector.load %arg4[%c0_28, %c0_29] : memref<16x256xf32, #tpu.memory_space<vmem>>, vector<16x256xf32>
    %cst_30 = arith.constant dense<0.000000e+00> : vector<1x256xf32>
    %36 = tpu.matmul %31, %35, %cst_30 {dimension_numbers = #tpu.dot_dimension_numbers<[1], [0], [0], [1], [0, 0, 1, 1], [], []>} : vector<1x16xf32>, vector<16x256xf32>, vector<1x256xf32> -> vector<1x256xf32>
    %c0_31 = arith.constant 0 : index
    %c0_32 = arith.constant 0 : index
    %37 = vector.load %arg4[%c0_31, %c0_32] : memref<16x256xf32, #tpu.memory_space<vmem>>, vector<16x256xf32>
    %cst_33 = arith.constant dense<0.000000e+00> : vector<1x256xf32>
    %38 = tpu.matmul %34, %37, %cst_33 {dimension_numbers = #tpu.dot_dimension_numbers<[1], [0], [0], [1], [0, 0, 1, 1], [], []>} : vector<1x16xf32>, vector<16x256xf32>, vector<1x256xf32> -> vector<1x256xf32>
    %39 = vector.broadcast %36 : vector<1x256xf32> to vector<32x256xf32>
    %40 = arith.mulf %11, %39 : vector<32x256xf32>
    %41 = vector.broadcast %38 : vector<1x256xf32> to vector<32x256xf32>
    %42 = arith.addf %40, %41 : vector<32x256xf32>
    %43 = arith.negf %42 : vector<32x256xf32>
    %44 = math.exp %43 : vector<32x256xf32>
    %cst_34 = arith.constant 1.000000e+00 : f32
    %45 = vector.broadcast %cst_34 : f32 to vector<32x256xf32>
    %46 = arith.addf %45, %44 : vector<32x256xf32>
    %47 = arith.divf %45, %46 : vector<32x256xf32>
    %cst_35 = arith.constant dense<0.000000e+00> : vector<2x256xf32>
    %48 = vector.multi_reduction <add>, %0, %cst_35 [1] : vector<2x16x256xf32> to vector<2x256xf32>
    %c0_36 = arith.constant 0 : index
    %c0_37 = arith.constant 0 : index
    %49 = vector.load %arg3[%c0_36, %c0_37] : memref<256x16xf32, #tpu.memory_space<vmem>>, vector<256x16xf32>
    %cst_38 = arith.constant dense<0.000000e+00> : vector<2x16xf32>
    %50 = tpu.matmul %48, %49, %cst_38 {dimension_numbers = #tpu.dot_dimension_numbers<[1], [0], [0], [1], [0, 0, 1, 1], [], []>} : vector<2x256xf32>, vector<256x16xf32>, vector<2x16xf32> -> vector<2x16xf32>
    %cst_39 = arith.constant 3.906250e-03 : f32
    %51 = vector.broadcast %cst_39 : f32 to vector<2x16xf32>
    %52 = arith.mulf %50, %51 : vector<2x16xf32>
    %53 = vector.shape_cast %52 : vector<2x16xf32> to vector<2x1x16xf32>
    %c0_40 = arith.constant 0 : index
    %c0_41 = arith.constant 0 : index
    %54 = vector.load %arg7[%c0_40, %c0_41] : memref<4x16xf32, #tpu.memory_space<vmem>>, vector<4x16xf32>
    %55 = vector.shape_cast %54 : vector<4x16xf32> to vector<1x4x16xf32>
    %56 = vector.broadcast %53 : vector<2x1x16xf32> to vector<2x4x16xf32>
    %57 = vector.broadcast %55 : vector<1x4x16xf32> to vector<2x4x16xf32>
    %58 = arith.mulf %56, %57 : vector<2x4x16xf32>
    %cst_42 = arith.constant dense<0.000000e+00> : vector<2x4xf32>
    %59 = vector.multi_reduction <add>, %58, %cst_42 [2] : vector<2x4x16xf32> to vector<2x4xf32>
    %c0_43 = arith.constant 0 : index
    %60 = memref.load %arg10[%c0_43] : memref<1xf32, #tpu.memory_space<smem>>
    %61 = vector.broadcast %60 : f32 to vector<2x4xf32>
    %62 = arith.mulf %59, %61 : vector<2x4xf32>
    %cst_44 = arith.constant dense<0xFF800000> : vector<2xf32>
    %63 = vector.multi_reduction <maximumf>, %62, %cst_44 [1] : vector<2x4xf32> to vector<2xf32>
    %64 = vector.shape_cast %63 : vector<2xf32> to vector<2x1xf32>
    %65 = vector.broadcast %64 : vector<2x1xf32> to vector<2x4xf32>
    %66 = arith.subf %62, %65 : vector<2x4xf32>
    %67 = math.exp %66 : vector<2x4xf32>
    %cst_45 = arith.constant dense<0.000000e+00> : vector<2xf32>
    %68 = vector.multi_reduction <add>, %67, %cst_45 [1] : vector<2x4xf32> to vector<2xf32>
    %69 = vector.shape_cast %68 : vector<2xf32> to vector<2x1xf32>
    %70 = vector.broadcast %69 : vector<2x1xf32> to vector<2x4xf32>
    %71 = arith.divf %67, %70 : vector<2x4xf32>
    %72 = arith.mulf %59, %71 : vector<2x4xf32>
    %73 = vector.shape_cast %59 : vector<2x4xf32> to vector<2x4x1xf32>
    %c0_46 = arith.constant 0 : index
    %c0_47 = arith.constant 0 : index
    %74 = vector.load %arg8[%c0_46, %c0_47] : memref<4x4xf32, #tpu.memory_space<vmem>>, vector<4x4xf32>
    %75 = vector.shape_cast %74 : vector<4x4xf32> to vector<1x4x4xf32>
    %76 = vector.broadcast %73 : vector<2x4x1xf32> to vector<2x4x4xf32>
    %77 = vector.broadcast %75 : vector<1x4x4xf32> to vector<2x4x4xf32>
    %78 = arith.mulf %76, %77 : vector<2x4x4xf32>
    %cst_48 = arith.constant dense<0.000000e+00> : vector<2x4xf32>
    %79 = vector.multi_reduction <add>, %78, %cst_48 [1] : vector<2x4x4xf32> to vector<2x4xf32>
    %80 = arith.addf %72, %79 : vector<2x4xf32>
    %c0_49 = arith.constant 0 : index
    %81 = memref.load %arg11[%c0_49] : memref<1xf32, #tpu.memory_space<smem>>
    %82 = vector.broadcast %81 : f32 to vector<2x4xf32>
    %83 = arith.mulf %80, %82 : vector<2x4xf32>
    %cst_50 = arith.constant 0.000000e+00 : f32
    %84 = vector.broadcast %cst_50 : f32 to vector<2x4xf32>
    %85 = arith.maximumf %83, %84 : vector<2x4xf32>
    %86 = vector.shape_cast %85 : vector<2x4xf32> to vector<2x4x1xf32>
    %c0_51 = arith.constant 0 : index
    %c0_52 = arith.constant 0 : index
    %87 = vector.load %arg9[%c0_51, %c0_52] : memref<4x16xf32, #tpu.memory_space<vmem>>, vector<4x16xf32>
    %88 = vector.shape_cast %87 : vector<4x16xf32> to vector<1x4x16xf32>
    %89 = vector.broadcast %86 : vector<2x4x1xf32> to vector<2x4x16xf32>
    %90 = vector.broadcast %88 : vector<1x4x16xf32> to vector<2x4x16xf32>
    %91 = arith.mulf %89, %90 : vector<2x4x16xf32>
    %cst_53 = arith.constant dense<0.000000e+00> : vector<2x16xf32>
    %92 = vector.multi_reduction <add>, %91, %cst_53 [1] : vector<2x4x16xf32> to vector<2x16xf32>
    %93 = arith.negf %92 : vector<2x16xf32>
    %94 = math.exp %93 : vector<2x16xf32>
    %cst_54 = arith.constant 1.000000e+00 : f32
    %95 = vector.broadcast %cst_54 : f32 to vector<2x16xf32>
    %96 = arith.addf %95, %94 : vector<2x16xf32>
    %97 = arith.divf %95, %96 : vector<2x16xf32>
    %c0_55 = arith.constant 0 : index
    %c0_56 = arith.constant 0 : index
    %98 = vector.load %arg4[%c0_55, %c0_56] : memref<16x256xf32, #tpu.memory_space<vmem>>, vector<16x256xf32>
    %cst_57 = arith.constant dense<0.000000e+00> : vector<2x256xf32>
    %99 = tpu.matmul %97, %98, %cst_57 {dimension_numbers = #tpu.dot_dimension_numbers<[1], [0], [0], [1], [0, 0, 1, 1], [], []>} : vector<2x16xf32>, vector<16x256xf32>, vector<2x256xf32> -> vector<2x256xf32>
    %100 = vector.shape_cast %99 : vector<2x256xf32> to vector<2x1x256xf32>
    %101 = vector.broadcast %100 : vector<2x1x256xf32> to vector<2x16x256xf32>
    %102 = arith.mulf %0, %101 : vector<2x16x256xf32>
    %103 = vector.shape_cast %47 : vector<32x256xf32> to vector<2x16x256xf32>
    %104 = arith.mulf %102, %103 : vector<2x16x256xf32>
    %c0_58 = arith.constant 0 : index
    %c0_59 = arith.constant 0 : index
    %c0_60 = arith.constant 0 : index
    %105 = vector.load %arg12[%c0_58, %c0_59, %c0_60] : memref<2x16x256xf32, #tpu.memory_space<vmem>>, vector<2x16x256xf32>
    tpu.vector_store %arg12[%c0_58, %c0_59, %c0_60], %104 {strides = array<i32>} : memref<2x16x256xf32, #tpu.memory_space<vmem>>, vector<2x16x256xf32>,
    return
  }
  func.func @transform_0(%arg0: i32) -> (i32, i32, i32) {
    %c0_i32 = arith.constant 0 : i32
    %c0_i32_0 = arith.constant 0 : i32
    %c0_i32_1 = arith.constant 0 : i32
    %c0_i32_2 = arith.constant 0 : i32
    return %c0_i32, %c0_i32_0, %c0_i32_1 : i32, i32, i32
  }
  func.func @transform_1(%arg0: i32) -> (i32, i32) {
    %c0_i32 = arith.constant 0 : i32
    %c0_i32_0 = arith.constant 0 : i32
    %c0_i32_1 = arith.constant 0 : i32
    return %c0_i32, %c0_i32_0 : i32, i32
  }
  func.func @transform_2(%arg0: i32) -> (i32, i32) {
    %c0_i32 = arith.constant 0 : i32
    %c0_i32_0 = arith.constant 0 : i32
    %c0_i32_1 = arith.constant 0 : i32
    return %c0_i32, %c0_i32_0 : i32, i32
  }
  func.func @transform_3(%arg0: i32) -> (i32, i32) {
    %c0_i32 = arith.constant 0 : i32
    %c0_i32_0 = arith.constant 0 : i32
    %c0_i32_1 = arith.constant 0 : i32
    return %c0_i32, %c0_i32_0 : i32, i32
  }
  func.func @transform_4(%arg0: i32) -> (i32, i32) {
    %c0_i32 = arith.constant 0 : i32
    %c0_i32_0 = arith.constant 0 : i32
    %c0_i32_1 = arith.constant 0 : i32
    return %c0_i32, %c0_i32_0 : i32, i32
  }
  func.func @transform_5(%arg0: i32) -> (i32, i32) {
    %c0_i32 = arith.constant 0 : i32
    %c0_i32_0 = arith.constant 0 : i32
    %c0_i32_1 = arith.constant 0 : i32
    return %c0_i32, %c0_i32_0 : i32, i32
  }
  func.func @transform_6(%arg0: i32) -> (i32, i32) {
    %c0_i32 = arith.constant 0 : i32
    %c0_i32_0 = arith.constant 0 : i32
    %c0_i32_1 = arith.constant 0 : i32
    return %c0_i32, %c0_i32_0 : i32, i32
  }
  func.func @transform_7(%arg0: i32) -> (i32, i32) {
    %c0_i32 = arith.constant 0 : i32
    %c0_i32_0 = arith.constant 0 : i32
    %c0_i32_1 = arith.constant 0 : i32
    return %c0_i32, %c0_i32_0 : i32, i32
  }
  func.func @transform_8(%arg0: i32) -> (i32, i32) {
    %c0_i32 = arith.constant 0 : i32
    %c0_i32_0 = arith.constant 0 : i32
    %c0_i32_1 = arith.constant 0 : i32
    return %c0_i32, %c0_i32_0 : i32, i32
  }
  func.func @transform_9(%arg0: i32) -> i32 {
    %c0_i32 = arith.constant 0 : i32
    %c0_i32_0 = arith.constant 0 : i32
    return %c0_i32 : i32
  }
  func.func @transform_10(%arg0: i32) -> i32 {
    %c0_i32 = arith.constant 0 : i32
    %c0_i32_0 = arith.constant 0 : i32
    return %c0_i32 : i32
  }
  func.func @transform_11(%arg0: i32) -> (i32, i32, i32) {
    %c0_i32 = arith.constant 0 : i32
    %c0_i32_0 = arith.constant 0 : i32
    %c0_i32_1 = arith.constant 0 : i32
    %c0_i32_2 = arith.constant 0 : i32
    return %c0_i32, %c0_i32_0, %c0_i32_1 : i32, i32, i32
  }
}

</mosaic_0001>

<llo_original>
// kernel: tile.9
$region0: #{tile.9}
  %s0 = inlined_call_operand.vmem [shape: f32[16,16,16], index: 0, kind: input, shape index: {}]
  %s1 = inlined_call_operand.vmem [shape: f32[256,16], index: 1, kind: output, shape index: {}]
  %v2 = vld [vmem:[%s0] ss:$8 sm:$0xf]
  %v3 = vld [vmem:[%s0] ss:$8 sm:$0xf0]
  %vm4 = vcmask 1047556
  %v5 = vsel %vm4, %v3, %v2
  %vm6 = vcmask 130048
  %7 = vst.msk [vmem:[%s1] ss:$8 sm:$0x3] %vm6, %v5
  %s8 = scalar_lea.vmem %s1, 4294967281
  %9 = vst.msk [vmem:[%s8] ss:$8 sm:$0xc] %vm6, %v5
  %s10 = scalar_lea.vmem %s1, 4294967266
  %11 = vst.msk [vmem:[%s10] ss:$8 sm:$0x30] %vm6, %v5
  %s12 = scalar_lea.vmem %s1, 4294967251
  %13 = vst.msk [vmem:[%s12] ss:$8 sm:$0xc0] %vm6, %v5
  %s14 = scalar_lea.vmem %s0, 64
  %v15 = vld [vmem:[%s14] ss:$8 sm:$0xf]
  %s16 = scalar_lea.vmem %s0, 64
  %v17 = vld [vmem:[%s16] ss:$8 sm:$0xf0]
  %vm18 = vcmask 1047556
  %v19 = vsel %vm18, %v17, %v15
  %vm20 = vcmask 130048
  %s21 = scalar_lea.vmem %s1, 4
  %22 = vst.msk [vmem:[%s21] ss:$8 sm:$0x3] %vm20, %v19
  %s23 = scalar_lea.vmem %s1, 4294967285
  %24 = vst.msk [vmem:[%s23] ss:$8 sm:$0xc] %vm20, %v19
  %s25 = scalar_lea.vmem %s1, 4294967270
  %26 = vst.msk [vmem:[%s25] ss:$8 sm:$0x30] %vm20, %v19
  %s27 = scalar_lea.vmem %s1, 4294967255
  %28 = vst.msk [vmem:[%s27] ss:$8 sm:$0xc0] %vm20, %v19
  %s29 = scalar_lea.vmem %s0, 128
  %v30 = vld [vmem:[%s29] ss:$8 sm:$0xf]
  %s31 = scalar_lea.vmem %s0, 128
  %v32 = vld [vmem:[%s31] ss:$8 sm:$0xf0]
  %vm33 = vcmask 1047556
  %v34 = vsel %vm33, %v32, %v30
  %vm35 = vcmask 130048
  %s36 = scalar_lea.vmem %s1, 16
  %37 = vst.msk [vmem:[%s36] ss:$8 sm:$0x3] %vm35, %v34
  %s38 = scalar_lea.vmem %s1, 1
  %39 = vst.msk [vmem:[%s38] ss:$8 sm:$0xc] %vm35, %v34
  %s40 = scalar_lea.vmem %s1, 4294967282
  %41 = vst.msk [vmem:[%s40] ss:$8 sm:$0x30] %vm35, %v34
  %s42 = scalar_lea.vmem %s1, 4294967267
  %43 = vst.msk [vmem:[%s42] ss:$8 sm:$0xc0] %vm35, %v34
  %s44 = scalar_lea.vmem %s0, 192
  %v45 = vld [vmem:[%s44] ss:$8 sm:$0xf]
  %s46 = scalar_lea.vmem %s0, 192
  %v47 = vld [vmem:[%s46] ss:$8 sm:$0xf0]
  %vm48 = vcmask 1047556
  %v49 = vsel %vm48, %v47, %v45
  %vm50 = vcmask 130048
  %s51 = scalar_lea.vmem %s1, 20
  %52 = vst.msk [vmem:[%s51] ss:$8 sm:$0x3] %vm50, %v49
  %s53 = scalar_lea.vmem %s1, 5
  %54 = vst.msk [vmem:[%s53] ss:$8 sm:$0xc] %vm50, %v49
  %s55 = scalar_lea.vmem %s1, 4294967286
  %56 = vst.msk [vmem:[%s55] ss:$8 sm:$0x30] %vm50, %v49
  %s57 = scalar_lea.vmem %s1, 4294967271
  %58 = vst.msk [vmem:[%s57] ss:$8 sm:$0xc0] %vm50, %v49
  %s59 = scalar_lea.vmem %s0, 7
  %s60 = smov 3
  %v61 = vld [vmem:[%s59] ss:$16 sm:%s60]
  %s62 = scalar_lea.vmem %s0, 7
  %s63 = smov 12
  %v64 = vld [vmem:[%s62] ss:$16 sm:%s63]
  %vm65 = vcmask 1043458
  %v66 = vsel %vm65, %v64, %v61
  %s67 = scalar_lea.vmem %s0, 7
  %s68 = smov 48
  %v69 = vld [vmem:[%s67] ss:$16 sm:%s68]
  %vm70 = vcmask 1045508
  %v71 = vsel %vm70, %v69, %v66
  %s72 = scalar_lea.vmem %s0, 7
  %s73 = smov 192
  %v74 = vld [vmem:[%s72] ss:$16 sm:%s73]
  %vm75 = vcmask 1047558
  %v76 = vsel %vm75, %v74, %v71
  %77 = vrot.lane.b32.xlu0 %v76, 112
  %v78 = vpop.permute.xlu0 %77
  %vm79 = vcmask 1048448
  %80 = vst.msk [vmem:[%s1] sm:$0xff] %vm79, %v78
  %s81 = scalar_lea.vmem %s0, 15
  %s82 = smov 3
  %v83 = vld [vmem:[%s81] ss:$16 sm:%s82]
  %s84 = scalar_lea.vmem %s0, 15
  %s85 = smov 12
  %v86 = vld [vmem:[%s84] ss:$16 sm:%s85]
  %vm87 = vcmask 1043458
  %v88 = vsel %vm87, %v86, %v83
  %s89 = scalar_lea.vmem %s0, 15
  %s90 = smov 48
  %v91 = vld [vmem:[%s89] ss:$16 sm:%s90]
  %vm92 = vcmask 1045508
  %v93 = vsel %vm92, %v91, %v88
  %s94 = scalar_lea.vmem %s0, 15
  %s95 = smov 192
  %v96 = vld [vmem:[%s94] ss:$16 sm:%s95]
  %vm97 = vcmask 1047558
  %v98 = vsel %vm97, %v96, %v93
  %99 = vrot.lane.b32.xlu0 %v98, 112
  %v100 = vpop.permute.xlu0 %99
  %vm101 = vcmask 1048448
  %s102 = scalar_lea.vmem %s1, 8
  %103 = vst.msk [vmem:[%s102] sm:$0xff] %vm101, %v100
  %s104 = scalar_lea.vmem %s0, 135
  %s105 = smov 3
  %v106 = vld [vmem:[%s104] ss:$16 sm:%s105]
  %s107 = scalar_lea.vmem %s0, 135
  %s108 = smov 12
  %v109 = vld [vmem:[%s107] ss:$16 sm:%s108]
  %vm110 = vcmask 1043458
  %v111 = vsel %vm110, %v109, %v106
  %s112 = scalar_lea.vmem %s0, 135
  %s113 = smov 48
  %v114 = vld [vmem:[%s112] ss:$16 sm:%s113]
  %vm115 = vcmask 1045508
  %v116 = vsel %vm115, %v114, %v111
  %s117 = scalar_lea.vmem %s0, 135
  %s118 = smov 192
  %v119 = vld [vmem:[%s117] ss:$16 sm:%s118]
  %vm120 = vcmask 1047558
  %v121 = vsel %vm120, %v119, %v116
  %122 = vrot.lane.b32.xlu0 %v121, 112
  %v123 = vpop.permute.xlu0 %122
  %vm124 = vcmask 1048448
  %s125 = scalar_lea.vmem %s1, 16
  %126 = vst.msk [vmem:[%s125] sm:$0xff] %vm124, %v123
  %s127 = scalar_lea.vmem %s0, 143
  %s128 = smov 3
  %v129 = vld [vmem:[%s127] ss:$16 sm:%s128]
  %s130 = scalar_lea.vmem %s0, 143
  %s131 = smov 12
  %v132 = vld [vmem:[%s130] ss:$16 sm:%s131]
  %vm133 = vcmask 1043458
  %v134 = vsel %vm133, %v132, %v129
  %s135 = scalar_lea.vmem %s0, 143
  %s136 = smov 48
  %v137 = vld [vmem:[%s135] ss:$16 sm:%s136]
  %vm138 = vcmask 1045508
  %v139 = vsel %vm138, %v137, %v134
  %s140 = scalar_lea.vmem %s0, 143
  %s141 = smov 192
  %v142 = vld [vmem:[%s140] ss:$16 sm:%s141]
  %vm143 = vcmask 1047558
  %v144 = vsel %vm143, %v142, %v139
  %145 = vrot.lane.b32.xlu0 %v144, 112
  %v146 = vpop.permute.xlu0 %145
  %vm147 = vcmask 1048448
  %s148 = scalar_lea.vmem %s1, 24
  %149 = vst.msk [vmem:[%s148] sm:$0xff] %vm147, %v146
  %s150 = scalar_lea.vmem %s0, 6
  %s151 = smov 3
  %v152 = vld [vmem:[%s150] ss:$16 sm:%s151]
  %s153 = scalar_lea.vmem %s0, 6
  %s154 = smov 12
  %v155 = vld [vmem:[%s153] ss:$16 sm:%s154]
  %vm156 = vcmask 1043458
  %v157 = vsel %vm156, %v155, %v152
  %s158 = scalar_lea.vmem %s0, 6
  %s159 = smov 48
  %v160 = vld [vmem:[%s158] ss:$16 sm:%s159]
  %vm161 = vcmask 1045508
  %v162 = vsel %vm161, %v160, %v157
  %s163 = scalar_lea.vmem %s0, 6
  %s164 = smov 192
  %v165 = vld [vmem:[%s163] ss:$16 sm:%s164]
  %vm166 = vcmask 1047558
  %v167 = vsel %vm166, %v165, %v162
  %168 = vrot.lane.b32.xlu0 %v167, 96
  %v169 = vpop.permute.xlu0 %168
  %vm170 = vcmask 917248
  %171 = vst.msk [vmem:[%s1] sm:$0xff] %vm170, %v169
  %s172 = scalar_lea.vmem %s0, 14
  %s173 = smov 3
  %v174 = vld [vmem:[%s172] ss:$16 sm:%s173]
  %s175 = scalar_lea.vmem %s0, 14
  %s176 = smov 12
  %v177 = vld [vmem:[%s175] ss:$16 sm:%s176]
  %vm178 = vcmask 1043458
  %v179 = vsel %vm178, %v177, %v174
  %s180 = scalar_lea.vmem %s0, 14
  %s181 = smov 48
  %v182 = vld [vmem:[%s180] ss:$16 sm:%s181]
  %vm183 = vcmask 1045508
  %v184 = vsel %vm183, %v182, %v179
  %s185 = scalar_lea.vmem %s0, 14
  %s186 = smov 192
  %v187 = vld [vmem:[%s185] ss:$16 sm:%s186]
  %vm188 = vcmask 1047558
  %v189 = vsel %vm188, %v187, %v184
  %190 = vrot.lane.b32.xlu0 %v189, 96
  %v191 = vpop.permute.xlu0 %190
  %vm192 = vcmask 917248
  %s193 = scalar_lea.vmem %s1, 8
  %194 = vst.msk [vmem:[%s193] sm:$0xff] %vm192, %v191
  %s195 = scalar_lea.vmem %s0, 134
  %s196 = smov 3
  %v197 = vld [vmem:[%s195] ss:$16 sm:%s196]
  %s198 = scalar_lea.vmem %s0, 134
  %s199 = smov 12
  %v200 = vld [vmem:[%s198] ss:$16 sm:%s199]
  %vm201 = vcmask 1043458
  %v202 = vsel %vm201, %v200, %v197
  %s203 = scalar_lea.vmem %s0, 134
  %s204 = smov 48
  %v205 = vld [vmem:[%s203] ss:$16 sm:%s204]
  %vm206 = vcmask 1045508
  %v207 = vsel %vm206, %v205, %v202
  %s208 = scalar_lea.vmem %s0, 134
  %s209 = smov 192
  %v210 = vld [vmem:[%s208] ss:$16 sm:%s209]
  %vm211 = vcmask 1047558
  %v212 = vsel %vm211, %v210, %v207
  %213 = vrot.lane.b32.xlu0 %v212, 96
  %v214 = vpop.permute.xlu0 %213
  %vm215 = vcmask 917248
  %s216 = scalar_lea.vmem %s1, 16
  %217 = vst.msk [vmem:[%s216] sm:$0xff] %vm215, %v214
  %s218 = scalar_lea.vmem %s0, 142
  %s219 = smov 3
  %v220 = vld [vmem:[%s218] ss:$16 sm:%s219]
  %s221 = scalar_lea.vmem %s0, 142
  %s222 = smov 12
  %v223 = vld [vmem:[%s221] ss:$16 sm:%s222]
  %vm224 = vcmask 1043458
  %v225 = vsel %vm224, %v223, %v220
  %s226 = scalar_lea.vmem %s0, 142
  %s227 = smov 48
  %v228 = vld [vmem:[%s226] ss:$16 sm:%s227]
  %vm229 = vcmask 1045508
  %v230 = vsel %vm229, %v228, %v225
  %s231 = scalar_lea.vmem %s0, 142
  %s232 = smov 192
  %v233 = vld [vmem:[%s231] ss:$16 sm:%s232]
  %vm234 = vcmask 1047558
  %v235 = vsel %vm234, %v233, %v230
  %236 = vrot.lane.b32.xlu0 %v235, 96
  %v237 = vpop.permute.xlu0 %236
  %vm238 = vcmask 917248
  %s239 = scalar_lea.vmem %s1, 24
  %240 = vst.msk [vmem:[%s239] sm:$0xff] %vm238, %v237
  %s241 = scalar_lea.vmem %s0, 5
  %s242 = smov 3
  %v243 = vld [vmem:[%s241] ss:$16 sm:%s242]
  %s244 = scalar_lea.vmem %s0, 5
  %s245 = smov 12
  %v246 = vld [vmem:[%s244] ss:$16 sm:%s245]
  %vm247 = vcmask 1043458
  %v248 = vsel %vm247, %v246, %v243
  %s249 = scalar_lea.vmem %s0, 5
  %s250 = smov 48
  %v251 = vld [vmem:[%s249] ss:$16 sm:%s250]
  %vm252 = vcmask 1045508
  %v253 = vsel %vm252, %v251, %v248
  %s254 = scalar_lea.vmem %s0, 5
  %s255 = smov 192
  %v256 = vld [vmem:[%s254] ss:$16 sm:%s255]
  %vm257 = vcmask 1047558
  %v258 = vsel %vm257, %v256, %v253
  %259 = vrot.lane.b32.xlu0 %v258, 80
  %v260 = vpop.permute.xlu0 %259
  %vm261 = vcmask 786048
  %262 = vst.msk [vmem:[%s1] sm:$0xff] %vm261, %v260
  %s263 = scalar_lea.vmem %s0, 13
  %s264 = smov 3
  %v265 = vld [vmem:[%s263] ss:$16 sm:%s264]
  %s266 = scalar_lea.vmem %s0, 13
  %s267 = smov 12
  %v268 = vld [vmem:[%s266] ss:$16 sm:%s267]
  %vm269 = vcmask 1043458
  %v270 = vsel %vm269, %v268, %v265
  %s271 = scalar_lea.vmem %s0, 13
  %s272 = smov 48
  %v273 = vld [vmem:[%s271] ss:$16 sm:%s272]
  %vm274 = vcmask 1045508
  %v275 = vsel %vm274, %v273, %v270
  %s276 = scalar_lea.vmem %s0, 13
  %s277 = smov 192
  %v278 = vld [vmem:[%s276] ss:$16 sm:%s277]
  %vm279 = vcmask 1047558
  %v280 = vsel %vm279, %v278, %v275
  %281 = vrot.lane.b32.xlu0 %v280, 80
  %v282 = vpop.permute.xlu0 %281
  %vm283 = vcmask 786048
  %s284 = scalar_lea.vmem %s1, 8
  %285 = vst.msk [vmem:[%s284] sm:$0xff] %vm283, %v282
  %s286 = scalar_lea.vmem %s0, 133
  %s287 = smov 3
  %v288 = vld [vmem:[%s286] ss:$16 sm:%s287]
  %s289 = scalar_lea.vmem %s0, 133
  %s290 = smov 12
  %v291 = vld [vmem:[%s289] ss:$16 sm:%s290]
  %vm292 = vcmask 1043458
  %v293 = vsel %vm292, %v291, %v288
  %s294 = scalar_lea.vmem %s0, 133
  %s295 = smov 48
  %v296 = vld [vmem:[%s294] ss:$16 sm:%s295]
  %vm297 = vcmask 1045508
  %v298 = vsel %vm297, %v296, %v293
  %s299 = scalar_lea.vmem %s0, 133
  %s300 = smov 192
  %v301 = vld [vmem:[%s299] ss:$16 sm:%s300]
  %vm302 = vcmask 1047558
  %v303 = vsel %vm302, %v301, %v298
  %304 = vrot.lane.b32.xlu0 %v303, 80
  %v305 = vpop.permute.xlu0 %304
  %vm306 = vcmask 786048
  %s307 = scalar_lea.vmem %s1, 16
  %308 = vst.msk [vmem:[%s307] sm:$0xff] %vm306, %v305
  %s309 = scalar_lea.vmem %s0, 141
  %s310 = smov 3
  %v311 = vld [vmem:[%s309] ss:$16 sm:%s310]
  %s312 = scalar_lea.vmem %s0, 141
  %s313 = smov 12
  %v314 = vld [vmem:[%s312] ss:$16 sm:%s313]
  %vm315 = vcmask 1043458
  %v316 = vsel %vm315, %v314, %v311
  %s317 = scalar_lea.vmem %s0, 141
  %s318 = smov 48
  %v319 = vld [vmem:[%s317] ss:$16 sm:%s318]
  %vm320 = vcmask 1045508
  %v321 = vsel %vm320, %v319, %v316
  %s322 = scalar_lea.vmem %s0, 141
  %s323 = smov 192
  %v324 = vld [vmem:[%s322] ss:$16 sm:%s323]
  %vm325 = vcmask 1047558
  %v326 = vsel %vm325, %v324, %v321
  %327 = vrot.lane.b32.xlu0 %v326, 80
  %v328 = vpop.permute.xlu0 %327
  %vm329 = vcmask 786048
  %s330 = scalar_lea.vmem %s1, 24
  %331 = vst.msk [vmem:[%s330] sm:$0xff] %vm329, %v328
  %s332 = scalar_lea.vmem %s0, 4
  %s333 = smov 3
  %v334 = vld [vmem:[%s332] ss:$16 sm:%s333]
  %s335 = scalar_lea.vmem %s0, 4
  %s336 = smov 12
  %v337 = vld [vmem:[%s335] ss:$16 sm:%s336]
  %vm338 = vcmask 1043458
  %v339 = vsel %vm338, %v337, %v334
  %s340 = scalar_lea.vmem %s0, 4
  %s341 = smov 48
  %v342 = vld [vmem:[%s340] ss:$16 sm:%s341]
  %vm343 = vcmask 1045508
  %v344 = vsel %vm343, %v342, %v339
  %s345 = scalar_lea.vmem %s0, 4
  %s346 = smov 192
  %v347 = vld [vmem:[%s345] ss:$16 sm:%s346]
  %vm348 = vcmask 1047558
  %v349 = vsel %vm348, %v347, %v344
  %350 = vrot.lane.b32.xlu0 %v349, 64
  %v351 = vpop.permute.xlu0 %350
  %vm352 = vcmask 654848
  %353 = vst.msk [vmem:[%s1] sm:$0xff] %vm352, %v351
  %s354 = scalar_lea.vmem %s0, 12
  %s355 = smov 3
  %v356 = vld [vmem:[%s354] ss:$16 sm:%s355]
  %s357 = scalar_lea.vmem %s0, 12
  %s358 = smov 12
  %v359 = vld [vmem:[%s357] ss:$16 sm:%s358]
  %vm360 = vcmask 1043458
  %v361 = vsel %vm360, %v359, %v356
  %s362 = scalar_lea.vmem %s0, 12
  %s363 = smov 48
  %v364 = vld [vmem:[%s362] ss:$16 sm:%s363]
  %vm365 = vcmask 1045508
  %v366 = vsel %vm365, %v364, %v361
  %s367 = scalar_lea.vmem %s0, 12
  %s368 = smov 192
  %v369 = vld [vmem:[%s367] ss:$16 sm:%s368]
  %vm370 = vcmask 1047558
  %v371 = vsel %vm370, %v369, %v366
  %372 = vrot.lane.b32.xlu0 %v371, 64
  %v373 = vpop.permute.xlu0 %372
  %vm374 = vcmask 654848
  %s375 = scalar_lea.vmem %s1, 8
  %376 = vst.msk [vmem:[%s375] sm:$0xff] %vm374, %v373
  %s377 = scalar_lea.vmem %s0, 132
  %s378 = smov 3
  %v379 = vld [vmem:[%s377] ss:$16 sm:%s378]
  %s380 = scalar_lea.vmem %s0, 132
  %s381 = smov 12
  %v382 = vld [vmem:[%s380] ss:$16 sm:%s381]
  %vm383 = vcmask 1043458
  %v384 = vsel %vm383, %v382, %v379
  %s385 = scalar_lea.vmem %s0, 132
  %s386 = smov 48
  %v387 = vld [vmem:[%s385] ss:$16 sm:%s386]
  %vm388 = vcmask 1045508
  %v389 = vsel %vm388, %v387, %v384
  %s390 = scalar_lea.vmem %s0, 132
  %s391 = smov 192
  %v392 = vld [vmem:[%s390] ss:$16 sm:%s391]
  %vm393 = vcmask 1047558
  %v394 = vsel %vm393, %v392, %v389
  %395 = vrot.lane.b32.xlu0 %v394, 64
  %v396 = vpop.permute.xlu0 %395
  %vm397 = vcmask 654848
  %s398 = scalar_lea.vmem %s1, 16
  %399 = vst.msk [vmem:[%s398] sm:$0xff] %vm397, %v396
  %s400 = scalar_lea.vmem %s0, 140
  %s401 = smov 3
  %v402 = vld [vmem:[%s400] ss:$16 sm:%s401]
  %s403 = scalar_lea.vmem %s0, 140
  %s404 = smov 12
  %v405 = vld [vmem:[%s403] ss:$16 sm:%s404]
  %vm406 = vcmask 1043458
  %v407 = vsel %vm406, %v405, %v402
  %s408 = scalar_lea.vmem %s0, 140
  %s409 = smov 48
  %v410 = vld [vmem:[%s408] ss:$16 sm:%s409]
  %vm411 = vcmask 1045508
  %v412 = vsel %vm411, %v410, %v407
  %s413 = scalar_lea.vmem %s0, 140
  %s414 = smov 192
  %v415 = vld [vmem:[%s413] ss:$16 sm:%s414]
  %vm416 = vcmask 1047558
  %v417 = vsel %vm416, %v415, %v412
  %418 = vrot.lane.b32.xlu0 %v417, 64
  %v419 = vpop.permute.xlu0 %418
  %vm420 = vcmask 654848
  %s421 = scalar_lea.vmem %s1, 24
  %422 = vst.msk [vmem:[%s421] sm:$0xff] %vm420, %v419
  %s423 = scalar_lea.vmem %s0, 3
  %s424 = smov 3
  %v425 = vld [vmem:[%s423] ss:$16 sm:%s424]
  %s426 = scalar_lea.vmem %s0, 3
  %s427 = smov 12
  %v428 = vld [vmem:[%s426] ss:$16 sm:%s427]
  %vm429 = vcmask 1043458
  %v430 = vsel %vm429, %v428, %v425
  %s431 = scalar_lea.vmem %s0, 3
  %s432 = smov 48
  %v433 = vld [vmem:[%s431] ss:$16 sm:%s432]
  %vm434 = vcmask 1045508
  %v435 = vsel %vm434, %v433, %v430
  %s436 = scalar_lea.vmem %s0, 3
  %s437 = smov 192
  %v438 = vld [vmem:[%s436] ss:$16 sm:%s437]
  %vm439 = vcmask 1047558
  %v440 = vsel %vm439, %v438, %v435
  %441 = vrot.lane.b32.xlu0 %v440, 48
  %v442 = vpop.permute.xlu0 %441
  %vm443 = vcmask 523648
  %444 = vst.msk [vmem:[%s1] sm:$0xff] %vm443, %v442
  %s445 = scalar_lea.vmem %s0, 11
  %s446 = smov 3
  %v447 = vld [vmem:[%s445] ss:$16 sm:%s446]
  %s448 = scalar_lea.vmem %s0, 11
  %s449 = smov 12
  %v450 = vld [vmem:[%s448] ss:$16 sm:%s449]
  %vm451 = vcmask 1043458
  %v452 = vsel %vm451, %v450, %v447
  %s453 = scalar_lea.vmem %s0, 11
  %s454 = smov 48
  %v455 = vld [vmem:[%s453] ss:$16 sm:%s454]
  %vm456 = vcmask 1045508
  %v457 = vsel %vm456, %v455, %v452
  %s458 = scalar_lea.vmem %s0, 11
  %s459 = smov 192
  %v460 = vld [vmem:[%s458] ss:$16 sm:%s459]
  %vm461 = vcmask 1047558
  %v462 = vsel %vm461, %v460, %v457
  %463 = vrot.lane.b32.xlu0 %v462, 48
  %v464 = vpop.permute.xlu0 %463
  %vm465 = vcmask 523648
  %s466 = scalar_lea.vmem %s1, 8
  %467 = vst.msk [vmem:[%s466] sm:$0xff] %vm465, %v464
  %s468 = scalar_lea.vmem %s0, 131
  %s469 = smov 3
  %v470 = vld [vmem:[%s468] ss:$16 sm:%s469]
  %s471 = scalar_lea.vmem %s0, 131
  %s472 = smov 12
  %v473 = vld [vmem:[%s471] ss:$16 sm:%s472]
  %vm474 = vcmask 1043458
  %v475 = vsel %vm474, %v473, %v470
  %s476 = scalar_lea.vmem %s0, 131
  %s477 = smov 48
  %v478 = vld [vmem:[%s476] ss:$16 sm:%s477]
  %vm479 = vcmask 1045508
  %v480 = vsel %vm479, %v478, %v475
  %s481 = scalar_lea.vmem %s0, 131
  %s482 = smov 192
  %v483 = vld [vmem:[%s481] ss:$16 sm:%s482]
  %vm484 = vcmask 1047558
  %v485 = vsel %vm484, %v483, %v480
  %486 = vrot.lane.b32.xlu0 %v485, 48
  %v487 = vpop.permute.xlu0 %486
  %vm488 = vcmask 523648
  %s489 = scalar_lea.vmem %s1, 16
  %490 = vst.msk [vmem:[%s489] sm:$0xff] %vm488, %v487
  %s491 = scalar_lea.vmem %s0, 139
  %s492 = smov 3
  %v493 = vld [vmem:[%s491] ss:$16 sm:%s492]
  %s494 = scalar_lea.vmem %s0, 139
  %s495 = smov 12
  %v496 = vld [vmem:[%s494] ss:$16 sm:%s495]
  %vm497 = vcmask 1043458
  %v498 = vsel %vm497, %v496, %v493
  %s499 = scalar_lea.vmem %s0, 139
  %s500 = smov 48
  %v501 = vld [vmem:[%s499] ss:$16 sm:%s500]
  %vm502 = vcmask 1045508
  %v503 = vsel %vm502, %v501, %v498
  %s504 = scalar_lea.vmem %s0, 139
  %s505 = smov 192
  %v506 = vld [vmem:[%s504] ss:$16 sm:%s505]
  %vm507 = vcmask 1047558
  %v508 = vsel %vm507, %v506, %v503
  %509 = vrot.lane.b32.xlu0 %v508, 48
  %v510 = vpop.permute.xlu0 %509
  %vm511 = vcmask 523648
  %s512 = scalar_lea.vmem %s1, 24
  %513 = vst.msk [vmem:[%s512] sm:$0xff] %vm511, %v510
  %s514 = scalar_lea.vmem %s0, 2
  %s515 = smov 3
  %v516 = vld [vmem:[%s514] ss:$16 sm:%s515]
  %s517 = scalar_lea.vmem %s0, 2
  %s518 = smov 12
  %v519 = vld [vmem:[%s517] ss:$16 sm:%s518]
  %vm520 = vcmask 1043458
  %v521 = vsel %vm520, %v519, %v516
  %s522 = scalar_lea.vmem %s0, 2
  %s523 = smov 48
  %v524 = vld [vmem:[%s522] ss:$16 sm:%s523]
  %vm525 = vcmask 1045508
  %v526 = vsel %vm525, %v524, %v521
  %s527 = scalar_lea.vmem %s0, 2
  %s528 = smov 192
  %v529 = vld [vmem:[%s527] ss:$16 sm:%s528]
  %vm530 = vcmask 1047558
  %v531 = vsel %vm530, %v529, %v526
  %532 = vrot.lane.b32.xlu0 %v531, 32
  %v533 = vpop.permute.xlu0 %532
  %vm534 = vcmask 392448
  %535 = vst.msk [vmem:[%s1] sm:$0xff] %vm534, %v533
  %s536 = scalar_lea.vmem %s0, 10
  %s537 = smov 3
  %v538 = vld [vmem:[%s536] ss:$16 sm:%s537]
  %s539 = scalar_lea.vmem %s0, 10
  %s540 = smov 12
  %v541 = vld [vmem:[%s539] ss:$16 sm:%s540]
  %vm542 = vcmask 1043458
  %v543 = vsel %vm542, %v541, %v538
  %s544 = scalar_lea.vmem %s0, 10
  %s545 = smov 48
  %v546 = vld [vmem:[%s544] ss:$16 sm:%s545]
  %vm547 = vcmask 1045508
  %v548 = vsel %vm547, %v546, %v543
  %s549 = scalar_lea.vmem %s0, 10
  %s550 = smov 192
  %v551 = vld [vmem:[%s549] ss:$16 sm:%s550]
  %vm552 = vcmask 1047558
  %v553 = vsel %vm552, %v551, %v548
  %554 = vrot.lane.b32.xlu0 %v553, 32
  %v555 = vpop.permute.xlu0 %554
  %vm556 = vcmask 392448
  %s557 = scalar_lea.vmem %s1, 8
  %558 = vst.msk [vmem:[%s557] sm:$0xff] %vm556, %v555
  %s559 = scalar_lea.vmem %s0, 130
  %s560 = smov 3
  %v561 = vld [vmem:[%s559] ss:$16 sm:%s560]
  %s562 = scalar_lea.vmem %s0, 130
  %s563 = smov 12
  %v564 = vld [vmem:[%s562] ss:$16 sm:%s563]
  %vm565 = vcmask 1043458
  %v566 = vsel %vm565, %v564, %v561
  %s567 = scalar_lea.vmem %s0, 130
  %s568 = smov 48
  %v569 = vld [vmem:[%s567] ss:$16 sm:%s568]
  %vm570 = vcmask 1045508
  %v571 = vsel %vm570, %v569, %v566
  %s572 = scalar_lea.vmem %s0, 130
  %s573 = smov 192
  %v574 = vld [vmem:[%s572] ss:$16 sm:%s573]
  %vm575 = vcmask 1047558
  %v576 = vsel %vm575, %v574, %v571
  %577 = vrot.lane.b32.xlu0 %v576, 32
  %v578 = vpop.permute.xlu0 %577
  %vm579 = vcmask 392448
  %s580 = scalar_lea.vmem %s1, 16
  %581 = vst.msk [vmem:[%s580] sm:$0xff] %vm579, %v578
  %s582 = scalar_lea.vmem %s0, 138
  %s583 = smov 3
  %v584 = vld [vmem:[%s582] ss:$16 sm:%s583]
  %s585 = scalar_lea.vmem %s0, 138
  %s586 = smov 12
  %v587 = vld [vmem:[%s585] ss:$16 sm:%s586]
  %vm588 = vcmask 1043458
  %v589 = vsel %vm588, %v587, %v584
  %s590 = scalar_lea.vmem %s0, 138
  %s591 = smov 48
  %v592 = vld [vmem:[%s590] ss:$16 sm:%s591]
  %vm593 = vcmask 1045508
  %v594 = vsel %vm593, %v592, %v589
  %s595 = scalar_lea.vmem %s0, 138
  %s596 = smov 192
  %v597 = vld [vmem:[%s595] ss:$16 sm:%s596]
  %vm598 = vcmask 1047558
  %v599 = vsel %vm598, %v597, %v594
  %600 = vrot.lane.b32.xlu0 %v599, 32
  %v601 = vpop.permute.xlu0 %600
  %vm602 = vcmask 392448
  %s603 = scalar_lea.vmem %s1, 24
  %604 = vst.msk [vmem:[%s603] sm:$0xff] %vm602, %v601
  %s605 = scalar_lea.vmem %s0, 1
  %s606 = smov 3
  %v607 = vld [vmem:[%s605] ss:$16 sm:%s606]
  %s608 = scalar_lea.vmem %s0, 1
  %s609 = smov 12
  %v610 = vld [vmem:[%s608] ss:$16 sm:%s609]
  %vm611 = vcmask 1043458
  %v612 = vsel %vm611, %v610, %v607
  %s613 = scalar_lea.vmem %s0, 1
  %s614 = smov 48
  %v615 = vld [vmem:[%s613] ss:$16 sm:%s614]
  %vm616 = vcmask 1045508
  %v617 = vsel %vm616, %v615, %v612
  %s618 = scalar_lea.vmem %s0, 1
  %s619 = smov 192
  %v620 = vld [vmem:[%s618] ss:$16 sm:%s619]
  %vm621 = vcmask 1047558
  %v622 = vsel %vm621, %v620, %v617
  %623 = vrot.lane.b32.xlu0 %v622, 16
  %v624 = vpop.permute.xlu0 %623
  %vm625 = vcmask 261248
  %626 = vst.msk [vmem:[%s1] sm:$0xff] %vm625, %v624
  %s627 = scalar_lea.vmem %s0, 9
  %s628 = smov 3
  %v629 = vld [vmem:[%s627] ss:$16 sm:%s628]
  %s630 = scalar_lea.vmem %s0, 9
  %s631 = smov 12
  %v632 = vld [vmem:[%s630] ss:$16 sm:%s631]
  %vm633 = vcmask 1043458
  %v634 = vsel %vm633, %v632, %v629
  %s635 = scalar_lea.vmem %s0, 9
  %s636 = smov 48
  %v637 = vld [vmem:[%s635] ss:$16 sm:%s636]
  %vm638 = vcmask 1045508
  %v639 = vsel %vm638, %v637, %v634
  %s640 = scalar_lea.vmem %s0, 9
  %s641 = smov 192
  %v642 = vld [vmem:[%s640] ss:$16 sm:%s641]
  %vm643 = vcmask 1047558
  %v644 = vsel %vm643, %v642, %v639
  %645 = vrot.lane.b32.xlu0 %v644, 16
  %v646 = vpop.permute.xlu0 %645
  %vm647 = vcmask 261248
  %s648 = scalar_lea.vmem %s1, 8
  %649 = vst.msk [vmem:[%s648] sm:$0xff] %vm647, %v646
  %s650 = scalar_lea.vmem %s0, 129
  %s651 = smov 3
  %v652 = vld [vmem:[%s650] ss:$16 sm:%s651]
  %s653 = scalar_lea.vmem %s0, 129
  %s654 = smov 12
  %v655 = vld [vmem:[%s653] ss:$16 sm:%s654]
  %vm656 = vcmask 1043458
  %v657 = vsel %vm656, %v655, %v652
  %s658 = scalar_lea.vmem %s0, 129
  %s659 = smov 48
  %v660 = vld [vmem:[%s658] ss:$16 sm:%s659]
  %vm661 = vcmask 1045508
  %v662 = vsel %vm661, %v660, %v657
  %s663 = scalar_lea.vmem %s0, 129
  %s664 = smov 192
  %v665 = vld [vmem:[%s663] ss:$16 sm:%s664]
  %vm666 = vcmask 1047558
  %v667 = vsel %vm666, %v665, %v662
  %668 = vrot.lane.b32.xlu0 %v667, 16
  %v669 = vpop.permute.xlu0 %668
  %vm670 = vcmask 261248
  %s671 = scalar_lea.vmem %s1, 16
  %672 = vst.msk [vmem:[%s671] sm:$0xff] %vm670, %v669
  %s673 = scalar_lea.vmem %s0, 137
  %s674 = smov 3
  %v675 = vld [vmem:[%s673] ss:$16 sm:%s674]
  %s676 = scalar_lea.vmem %s0, 137
  %s677 = smov 12
  %v678 = vld [vmem:[%s676] ss:$16 sm:%s677]
  %vm679 = vcmask 1043458
  %v680 = vsel %vm679, %v678, %v675
  %s681 = scalar_lea.vmem %s0, 137
  %s682 = smov 48
  %v683 = vld [vmem:[%s681] ss:$16 sm:%s682]
  %vm684 = vcmask 1045508
  %v685 = vsel %vm684, %v683, %v680
  %s686 = scalar_lea.vmem %s0, 137
  %s687 = smov 192
  %v688 = vld [vmem:[%s686] ss:$16 sm:%s687]
  %vm689 = vcmask 1047558
  %v690 = vsel %vm689, %v688, %v685
  %691 = vrot.lane.b32.xlu0 %v690, 16
  %v692 = vpop.permute.xlu0 %691
  %vm693 = vcmask 261248
  %s694 = scalar_lea.vmem %s1, 24
  %695 = vst.msk [vmem:[%s694] sm:$0xff] %vm693, %v692

// kernel: aff_forward.1
$region0: #{aff_forward.1}
  #allocation0 [shape = 'u32[]', space=smem, size = 0x4, offset = 0x4, fixed_abs, tag = 'smem constant byte address 0x4 - core index']
  #allocation1 [shape = 'u32[144,128]{1,0:T(1,128)}', space=vmem, size = 0x12000, scoped, tag = 'internal scratch']
  #allocation2 [shape = 'f32[2,18,256]{2,1,0:T(8,128)}', space=vmem, size = 0xc000, scoped, tag = 'scratch operand']
  #allocation3 [shape = 'f32[1]{0:T(128)S(6)}', space=smem, size = 0x200, scoped, tag = 'scoped memory for aff_forward.1']
  #allocation4 [shape = 'f32[1]{0:T(128)S(6)}', space=smem, size = 0x200, scoped, tag = 'scoped memory for aff_forward.1']
  %s0 = inlined_call_operand.vmem [shape: f32[2,16,256], index: 0, kind: input, shape index: {}]
  %s1 = inlined_call_operand.vmem [shape: f32[768,256], index: 1, kind: input, shape index: {}]
  %s2 = inlined_call_operand.vmem [shape: f32[256,16], index: 2, kind: input, shape index: {}]
  %s3 = inlined_call_operand.vmem [shape: f32[16,256], index: 3, kind: input, shape index: {}]
  %s4 = inlined_call_operand.vmem [shape: f32[1,16], index: 4, kind: input, shape index: {}]
  %s5 = inlined_call_operand.vmem [shape: f32[1,16], index: 5, kind: input, shape index: {}]
  %s6 = inlined_call_operand.vmem [shape: f32[4,16], index: 6, kind: input, shape index: {}]
  %s7 = inlined_call_operand.vmem [shape: f32[4,4], index: 7, kind: input, shape index: {}]
  %s8 = inlined_call_operand.vmem [shape: f32[4,16], index: 8, kind: input, shape index: {}]
  %s9 = inlined_call_operand.<no memory space> [shape: f32[1], index: 9, kind: input, shape index: {}]
  %s10 = inlined_call_operand.<no memory space> [shape: f32[1], index: 10, kind: input, shape index: {}]
  %s11 = inlined_call_operand.vmem [shape: f32[2,16,256], index: 11, kind: output, shape index: {}]
  %s12 = sld [smem:[#allocation0]]
  $region54: #{aff_forward.1} parent=0
    _
  %s14 = ssub.s32 1, %s12
  %s15 = scalar_select 0, %s14, %s12
  %16 = sst [smem:[#allocation3]] %s9
  %17 = sst [smem:[#allocation4]] %s10
  // Predicated region
  $region2: #{aff_forward.1} parent=0 // pred_check
    _
  $region3: #{aff_forward.1} parent=0 // pred_check_branch
    %19 = sbr.rel (0) target = $region5
  $region4: #{aff_forward.1} parent=0 // pred_region
    _
  $region5: #{aff_forward.1} parent=0 // pred_fallthru
    _
  // Predicated region
  $region6: #{aff_forward.1} parent=0 // pred_check
    _
  $region7: #{aff_forward.1} parent=0 // pred_check_branch
    %21 = sbr.rel (0) target = $region9
  $region8: #{aff_forward.1} parent=0 // pred_region
    _
  $region9: #{aff_forward.1} parent=0 // pred_fallthru
    _
  // Predicated region
  $region10: #{aff_forward.1} parent=0 // pred_check
    _
  $region11: #{aff_forward.1} parent=0 // pred_check_branch
    %23 = sbr.rel (0) target = $region13
  $region12: #{aff_forward.1} parent=0 // pred_region
    _
  $region13: #{aff_forward.1} parent=0 // pred_fallthru
    _
  // Predicated region
  $region14: #{aff_forward.1} parent=0 // pred_check
    _
  $region15: #{aff_forward.1} parent=0 // pred_check_branch
    %25 = sbr.rel (0) target = $region17
  $region16: #{aff_forward.1} parent=0 // pred_region
    _
  $region17: #{aff_forward.1} parent=0 // pred_fallthru
    _
  // Predicated region
  $region18: #{aff_forward.1} parent=0 // pred_check
    _
  $region19: #{aff_forward.1} parent=0 // pred_check_branch
    %27 = sbr.rel (0) target = $region21
  $region20: #{aff_forward.1} parent=0 // pred_region
    _
  $region21: #{aff_forward.1} parent=0 // pred_fallthru
    _
  // Predicated region
  $region22: #{aff_forward.1} parent=0 // pred_check
    _
  $region23: #{aff_forward.1} parent=0 // pred_check_branch
    %29 = sbr.rel (0) target = $region25
  $region24: #{aff_forward.1} parent=0 // pred_region
    _
  $region25: #{aff_forward.1} parent=0 // pred_fallthru
    _
  // Predicated region
  $region26: #{aff_forward.1} parent=0 // pred_check
    _
  $region27: #{aff_forward.1} parent=0 // pred_check_branch
    %31 = sbr.rel (0) target = $region29
  $region28: #{aff_forward.1} parent=0 // pred_region
    _
  $region29: #{aff_forward.1} parent=0 // pred_fallthru
    _
  // Predicated region
  $region30: #{aff_forward.1} parent=0 // pred_check
    _
  $region31: #{aff_forward.1} parent=0 // pred_check_branch
    %33 = sbr.rel (0) target = $region33
  $region32: #{aff_forward.1} parent=0 // pred_region
    _
  $region33: #{aff_forward.1} parent=0 // pred_fallthru
    _
  // Predicated region
  $region34: #{aff_forward.1} parent=0 // pred_check
    _
  $region35: #{aff_forward.1} parent=0 // pred_check_branch
    %35 = sbr.rel (0) target = $region37
  $region36: #{aff_forward.1} parent=0 // pred_region
    _
  $region37: #{aff_forward.1} parent=0 // pred_fallthru
    _
  // Predicated region
  $region38: #{aff_forward.1} parent=0 // pred_check
    _
  $region39: #{aff_forward.1} parent=0 // pred_check_branch
    %37 = sbr.rel (0) target = $region41
  $region40: #{aff_forward.1} parent=0 // pred_region
    _
  $region41: #{aff_forward.1} parent=0 // pred_fallthru
    _
  // Predicated region
  $region42: #{aff_forward.1} parent=0 // pred_check
    _
  $region43: #{aff_forward.1} parent=0 // pred_check_branch
    %39 = sbr.rel (0) target = $region45
  $region44: #{aff_forward.1} parent=0 // pred_region
    _
  $region45: #{aff_forward.1} parent=0 // pred_fallthru
    _
  %v40 = vld [vmem:[%s0] sm:$0xff]
  %v41 = vld [vmem:[%s0 + $0x8] sm:$0xff]
  %v42 = vld [vmem:[%s0 + $0x10] sm:$0xff]
  %v43 = vld [vmem:[%s0 + $0x18] sm:$0xff]
  %v44 = vld [vmem:[%s0 + $0x20] sm:$0xff]
  %v45 = vld [vmem:[%s0 + $0x28] sm:$0xff]
  %v46 = vld [vmem:[%s0 + $0x30] sm:$0xff]
  %v47 = vld [vmem:[%s0 + $0x38] sm:$0xff]
  %48 = vst [vmem:[#allocation2] sm:$0xff] 0.0
  %49 = vst [vmem:[#allocation2 + $0x8] sm:$0xff] 0.0
  %50 = vst [vmem:[#allocation2 + $0x10] sm:$0xff] 0.0
  %51 = vst [vmem:[#allocation2 + $0x18] sm:$0xff] 0.0
  %52 = vst [vmem:[#allocation2 + $0x20] sm:$0x3] 0.0
  %53 = vst [vmem:[#allocation2 + $0x28] sm:$0x3] 0.0
  %54 = vst [vmem:[#allocation2 + $0x30] sm:$0xff] 0.0
  %55 = vst [vmem:[#allocation2 + $0x38] sm:$0xff] 0.0
  %56 = vst [vmem:[#allocation2 + $0x40] sm:$0xff] 0.0
  %57 = vst [vmem:[#allocation2 + $0x48] sm:$0xff] 0.0
  %58 = vst [vmem:[#allocation2 + $0x50] sm:$0x3] 0.0
  %59 = vst [vmem:[#allocation2 + $0x58] sm:$0x3] 0.0
  %vm68 = vcmask 1040384
  %v69 = vrot.slane %v40, 7
  %v70 = vrot.slane %v41, 7
  %v71 = vrot.slane %v42, 7
  %v72 = vsel %vm68, %v69, %v71
  %v73 = vrot.slane %v43, 7
  %v74 = vsel %vm68, %v70, %v73
  %v75 = vrot.slane %v44, 7
  %v76 = vrot.slane %v45, 7
  %v77 = vrot.slane %v46, 7
  %v78 = vsel %vm68, %v75, %v77
  %v79 = vrot.slane %v47, 7
  %v80 = vsel %vm68, %v76, %v79
  %93 = vst [vmem:[#allocation2] sm:$0xfe] %v69
  %94 = vst [vmem:[#allocation2 + $0x8] sm:$0xfe] %v70
  %95 = vst [vmem:[#allocation2 + $0x10] sm:$0xff] %v72
  %96 = vst [vmem:[#allocation2 + $0x18] sm:$0xff] %v74
  %97 = vst [vmem:[#allocation2 + $0x20] sm:$0x1] %v71
  %98 = vst [vmem:[#allocation2 + $0x28] sm:$0x1] %v73
  %99 = vst [vmem:[#allocation2 + $0x30] sm:$0xfe] %v75
  %100 = vst [vmem:[#allocation2 + $0x38] sm:$0xfe] %v76
  %101 = vst [vmem:[#allocation2 + $0x40] sm:$0xff] %v78
  %102 = vst [vmem:[#allocation2 + $0x48] sm:$0xff] %v80
  %103 = vst [vmem:[#allocation2 + $0x50] sm:$0x1] %v77
  %104 = vst [vmem:[#allocation2 + $0x58] sm:$0x1] %v79
  %v105 = vld [vmem:[#allocation2] sm:$0xff]
  %v106 = vld [vmem:[#allocation2 + $0x8] sm:$0xff]
  %v107 = vld [vmem:[#allocation2 + $0x10] sm:$0xff]
  %v108 = vld [vmem:[#allocation2 + $0x18] sm:$0xff]
  %v109 = vld [vmem:[#allocation2 + $0x20] sm:$0x3]
  %v110 = vld [vmem:[#allocation2 + $0x28] sm:$0x3]
  %v111 = vld [vmem:[#allocation2 + $0x30] sm:$0xff]
  %v112 = vld [vmem:[#allocation2 + $0x38] sm:$0xff]
  %v113 = vld [vmem:[#allocation2 + $0x40] sm:$0xff]
  %v114 = vld [vmem:[#allocation2 + $0x48] sm:$0xff]
  %v115 = vld [vmem:[#allocation2 + $0x50] sm:$0x3]
  %v116 = vld [vmem:[#allocation2 + $0x58] sm:$0x3]
  %vm129 = vcmask 1046528
  %v130 = vrot.slane %v105, 1
  %v131 = vrot.slane %v107, 1
  %v132 = vsel %vm129, %v130, %v131
  %v133 = vrot.slane %v106, 1
  %v134 = vrot.slane %v108, 1
  %v135 = vsel %vm129, %v133, %v134
  %v136 = vrot.slane %v109, 1
  %v137 = vsel %vm129, %v131, %v136
  %v138 = vrot.slane %v110, 1
  %v139 = vsel %vm129, %v134, %v138
  %v140 = vrot.slane %v111, 1
  %v141 = vrot.slane %v113, 1
  %v142 = vsel %vm129, %v140, %v141
  %v143 = vrot.slane %v112, 1
  %v144 = vrot.slane %v114, 1
  %v145 = vsel %vm129, %v143, %v144
  %v146 = vrot.slane %v115, 1
  %v147 = vsel %vm129, %v141, %v146
  %v148 = vrot.slane %v116, 1
  %v149 = vsel %vm129, %v144, %v148
  %vm158 = vcmask 1045504
  %v159 = vrot.slane %v105, 2
  %v160 = vrot.slane %v107, 2
  %v161 = vsel %vm158, %v159, %v160
  %v162 = vrot.slane %v106, 2
  %v163 = vrot.slane %v108, 2
  %v164 = vsel %vm158, %v162, %v163
  %v165 = vrot.slane %v109, 2
  %v166 = vsel %vm158, %v160, %v165
  %v167 = vrot.slane %v110, 2
  %v168 = vsel %vm158, %v163, %v167
  %v169 = vrot.slane %v111, 2
  %v170 = vrot.slane %v113, 2
  %v171 = vsel %vm158, %v169, %v170
  %v172 = vrot.slane %v112, 2
  %v173 = vrot.slane %v114, 2
  %v174 = vsel %vm158, %v172, %v173
  %v175 = vrot.slane %v115, 2
  %v176 = vsel %vm158, %v170, %v175
  %v177 = vrot.slane %v116, 2
  %v178 = vsel %vm158, %v173, %v177
  %v187 = vld [vmem:[%s1] sm:$0xff]
  %v188 = vld [vmem:[%s1 + $0x8] sm:$0xff]
  %v189 = vld [vmem:[%s1 + $0x10] sm:$0xff]
  %v190 = vld [vmem:[%s1 + $0x18] sm:$0xff]
  %v191 = vld [vmem:[%s1 + $0x20] sm:$0xff]
  %v192 = vld [vmem:[%s1 + $0x28] sm:$0xff]
  %v193 = vld [vmem:[%s1 + $0x30] sm:$0xff]
  %v194 = vld [vmem:[%s1 + $0x38] sm:$0xff]
  %v195 = vld [vmem:[%s1 + $0x40] sm:$0xff]
  %v196 = vld [vmem:[%s1 + $0x48] sm:$0xff]
  %v197 = vld [vmem:[%s1 + $0x50] sm:$0xff]
  %v198 = vld [vmem:[%s1 + $0x58] sm:$0xff]
  %v199 = vld [vmem:[%s1 + $0x60] sm:$0xff]
  %v200 = vld [vmem:[%s1 + $0x68] sm:$0xff]
  %v201 = vld [vmem:[%s1 + $0x70] sm:$0xff]
  %v202 = vld [vmem:[%s1 + $0x78] sm:$0xff]
  %v203 = vld [vmem:[%s1 + $0x80] sm:$0xff]
  %v204 = vld [vmem:[%s1 + $0x88] sm:$0xff]
  %v205 = vld [vmem:[%s1 + $0x90] sm:$0xff]
  %v206 = vld [vmem:[%s1 + $0x98] sm:$0xff]
  %v207 = vld [vmem:[%s1 + $0xa0] sm:$0xff]
  %v208 = vld [vmem:[%s1 + $0xa8] sm:$0xff]
  %v209 = vld [vmem:[%s1 + $0xb0] sm:$0xff]
  %v210 = vld [vmem:[%s1 + $0xb8] sm:$0xff]
  %v211 = vld [vmem:[%s1 + $0xc0] sm:$0xff]
  %v212 = vld [vmem:[%s1 + $0xc8] sm:$0xff]
  %v213 = vld [vmem:[%s1 + $0xd0] sm:$0xff]
  %v214 = vld [vmem:[%s1 + $0xd8] sm:$0xff]
  %v215 = vld [vmem:[%s1 + $0xe0] sm:$0xff]
  %v216 = vld [vmem:[%s1 + $0xe8] sm:$0xff]
  %v217 = vld [vmem:[%s1 + $0xf0] sm:$0xff]
  %v218 = vld [vmem:[%s1 + $0xf8] sm:$0xff]
  %v219 = vld [vmem:[%s1 + $0x100] sm:$0xff]
  %v220 = vld [vmem:[%s1 + $0x108] sm:$0xff]
  %v221 = vld [vmem:[%s1 + $0x110] sm:$0xff]
  %v222 = vld [vmem:[%s1 + $0x118] sm:$0xff]
  %v223 = vld [vmem:[%s1 + $0x120] sm:$0xff]
  %v224 = vld [vmem:[%s1 + $0x128] sm:$0xff]
  %v225 = vld [vmem:[%s1 + $0x130] sm:$0xff]
  %v226 = vld [vmem:[%s1 + $0x138] sm:$0xff]
  %v227 = vld [vmem:[%s1 + $0x140] sm:$0xff]
  %v228 = vld [vmem:[%s1 + $0x148] sm:$0xff]
  %v229 = vld [vmem:[%s1 + $0x150] sm:$0xff]
  %v230 = vld [vmem:[%s1 + $0x158] sm:$0xff]
  %v231 = vld [vmem:[%s1 + $0x160] sm:$0xff]
  %v232 = vld [vmem:[%s1 + $0x168] sm:$0xff]
  %v233 = vld [vmem:[%s1 + $0x170] sm:$0xff]
  %v234 = vld [vmem:[%s1 + $0x178] sm:$0xff]
  %v235 = vld [vmem:[%s1 + $0x180] sm:$0xff]
  %v236 = vld [vmem:[%s1 + $0x188] sm:$0xff]
  %v237 = vld [vmem:[%s1 + $0x190] sm:$0xff]
  %v238 = vld [vmem:[%s1 + $0x198] sm:$0xff]
  %v239 = vld [vmem:[%s1 + $0x1a0] sm:$0xff]
  %v240 = vld [vmem:[%s1 + $0x1a8] sm:$0xff]
  %v241 = vld [vmem:[%s1 + $0x1b0] sm:$0xff]
  %v242 = vld [vmem:[%s1 + $0x1b8] sm:$0xff]
  %v243 = vld [vmem:[%s1 + $0x1c0] sm:$0xff]
  %v244 = vld [vmem:[%s1 + $0x1c8] sm:$0xff]
  %v245 = vld [vmem:[%s1 + $0x1d0] sm:$0xff]
  %v246 = vld [vmem:[%s1 + $0x1d8] sm:$0xff]
  %v247 = vld [vmem:[%s1 + $0x1e0] sm:$0xff]
  %v248 = vld [vmem:[%s1 + $0x1e8] sm:$0xff]
  %v249 = vld [vmem:[%s1 + $0x1f0] sm:$0xff]
  %v250 = vld [vmem:[%s1 + $0x1f8] sm:$0xff]
  %v251 = vld [vmem:[%s1 + $0x200] sm:$0xff]
  %v252 = vld [vmem:[%s1 + $0x208] sm:$0xff]
  %v253 = vld [vmem:[%s1 + $0x210] sm:$0xff]
  %v254 = vld [vmem:[%s1 + $0x218] sm:$0xff]
  %v255 = vld [vmem:[%s1 + $0x220] sm:$0xff]
  %v256 = vld [vmem:[%s1 + $0x228] sm:$0xff]
  %v257 = vld [vmem:[%s1 + $0x230] sm:$0xff]
  %v258 = vld [vmem:[%s1 + $0x238] sm:$0xff]
  %v259 = vld [vmem:[%s1 + $0x240] sm:$0xff]
  %v260 = vld [vmem:[%s1 + $0x248] sm:$0xff]
  %v261 = vld [vmem:[%s1 + $0x250] sm:$0xff]
  %v262 = vld [vmem:[%s1 + $0x258] sm:$0xff]
  %v263 = vld [vmem:[%s1 + $0x260] sm:$0xff]
  %v264 = vld [vmem:[%s1 + $0x268] sm:$0xff]
  %v265 = vld [vmem:[%s1 + $0x270] sm:$0xff]
  %v266 = vld [vmem:[%s1 + $0x278] sm:$0xff]
  %v267 = vld [vmem:[%s1 + $0x280] sm:$0xff]
  %v268 = vld [vmem:[%s1 + $0x288] sm:$0xff]
  %v269 = vld [vmem:[%s1 + $0x290] sm:$0xff]
  %v270 = vld [vmem:[%s1 + $0x298] sm:$0xff]
  %v271 = vld [vmem:[%s1 + $0x2a0] sm:$0xff]
  %v272 = vld [vmem:[%s1 + $0x2a8] sm:$0xff]
  %v273 = vld [vmem:[%s1 + $0x2b0] sm:$0xff]
  %v274 = vld [vmem:[%s1 + $0x2b8] sm:$0xff]
  %v275 = vld [vmem:[%s1 + $0x2c0] sm:$0xff]
  %v276 = vld [vmem:[%s1 + $0x2c8] sm:$0xff]
  %v277 = vld [vmem:[%s1 + $0x2d0] sm:$0xff]
  %v278 = vld [vmem:[%s1 + $0x2d8] sm:$0xff]
  %v279 = vld [vmem:[%s1 + $0x2e0] sm:$0xff]
  %v280 = vld [vmem:[%s1 + $0x2e8] sm:$0xff]
  %v281 = vld [vmem:[%s1 + $0x2f0] sm:$0xff]
  %v282 = vld [vmem:[%s1 + $0x2f8] sm:$0xff]
  %v283 = vld [vmem:[%s1 + $0x300] sm:$0xff]
  %v284 = vld [vmem:[%s1 + $0x308] sm:$0xff]
  %v285 = vld [vmem:[%s1 + $0x310] sm:$0xff]
  %v286 = vld [vmem:[%s1 + $0x318] sm:$0xff]
  %v287 = vld [vmem:[%s1 + $0x320] sm:$0xff]
  %v288 = vld [vmem:[%s1 + $0x328] sm:$0xff]
  %v289 = vld [vmem:[%s1 + $0x330] sm:$0xff]
  %v290 = vld [vmem:[%s1 + $0x338] sm:$0xff]
  %v291 = vld [vmem:[%s1 + $0x340] sm:$0xff]
  %v292 = vld [vmem:[%s1 + $0x348] sm:$0xff]
  %v293 = vld [vmem:[%s1 + $0x350] sm:$0xff]
  %v294 = vld [vmem:[%s1 + $0x358] sm:$0xff]
  %v295 = vld [vmem:[%s1 + $0x360] sm:$0xff]
  %v296 = vld [vmem:[%s1 + $0x368] sm:$0xff]
  %v297 = vld [vmem:[%s1 + $0x370] sm:$0xff]
  %v298 = vld [vmem:[%s1 + $0x378] sm:$0xff]
  %v299 = vld [vmem:[%s1 + $0x380] sm:$0xff]
  %v300 = vld [vmem:[%s1 + $0x388] sm:$0xff]
  %v301 = vld [vmem:[%s1 + $0x390] sm:$0xff]
  %v302 = vld [vmem:[%s1 + $0x398] sm:$0xff]
  %v303 = vld [vmem:[%s1 + $0x3a0] sm:$0xff]
  %v304 = vld [vmem:[%s1 + $0x3a8] sm:$0xff]
  %v305 = vld [vmem:[%s1 + $0x3b0] sm:$0xff]
  %v306 = vld [vmem:[%s1 + $0x3b8] sm:$0xff]
  %v307 = vld [vmem:[%s1 + $0x3c0] sm:$0xff]
  %v308 = vld [vmem:[%s1 + $0x3c8] sm:$0xff]
  %v309 = vld [vmem:[%s1 + $0x3d0] sm:$0xff]
  %v310 = vld [vmem:[%s1 + $0x3d8] sm:$0xff]
  %v311 = vld [vmem:[%s1 + $0x3e0] sm:$0xff]
  %v312 = vld [vmem:[%s1 + $0x3e8] sm:$0xff]
  %v313 = vld [vmem:[%s1 + $0x3f0] sm:$0xff]
  %v314 = vld [vmem:[%s1 + $0x3f8] sm:$0xff]
  %v315 = vld [vmem:[%s1 + $0x400] sm:$0xff]
  %v316 = vld [vmem:[%s1 + $0x408] sm:$0xff]
  %v317 = vld [vmem:[%s1 + $0x410] sm:$0xff]
  %v318 = vld [vmem:[%s1 + $0x418] sm:$0xff]
  %v319 = vld [vmem:[%s1 + $0x420] sm:$0xff]
  %v320 = vld [vmem:[%s1 + $0x428] sm:$0xff]
  %v321 = vld [vmem:[%s1 + $0x430] sm:$0xff]
  %v322 = vld [vmem:[%s1 + $0x438] sm:$0xff]
  %v323 = vld [vmem:[%s1 + $0x440] sm:$0xff]
  %v324 = vld [vmem:[%s1 + $0x448] sm:$0xff]
  %v325 = vld [vmem:[%s1 + $0x450] sm:$0xff]
  %v326 = vld [vmem:[%s1 + $0x458] sm:$0xff]
  %v327 = vld [vmem:[%s1 + $0x460] sm:$0xff]
  %v328 = vld [vmem:[%s1 + $0x468] sm:$0xff]
  %v329 = vld [vmem:[%s1 + $0x470] sm:$0xff]
  %v330 = vld [vmem:[%s1 + $0x478] sm:$0xff]
  %v331 = vld [vmem:[%s1 + $0x480] sm:$0xff]
  %v332 = vld [vmem:[%s1 + $0x488] sm:$0xff]
  %v333 = vld [vmem:[%s1 + $0x490] sm:$0xff]
  %v334 = vld [vmem:[%s1 + $0x498] sm:$0xff]
  %v335 = vld [vmem:[%s1 + $0x4a0] sm:$0xff]
  %v336 = vld [vmem:[%s1 + $0x4a8] sm:$0xff]
  %v337 = vld [vmem:[%s1 + $0x4b0] sm:$0xff]
  %v338 = vld [vmem:[%s1 + $0x4b8] sm:$0xff]
  %v339 = vld [vmem:[%s1 + $0x4c0] sm:$0xff]
  %v340 = vld [vmem:[%s1 + $0x4c8] sm:$0xff]
  %v341 = vld [vmem:[%s1 + $0x4d0] sm:$0xff]
  %v342 = vld [vmem:[%s1 + $0x4d8] sm:$0xff]
  %v343 = vld [vmem:[%s1 + $0x4e0] sm:$0xff]
  %v344 = vld [vmem:[%s1 + $0x4e8] sm:$0xff]
  %v345 = vld [vmem:[%s1 + $0x4f0] sm:$0xff]
  %v346 = vld [vmem:[%s1 + $0x4f8] sm:$0xff]
  %v347 = vld [vmem:[%s1 + $0x500] sm:$0xff]
  %v348 = vld [vmem:[%s1 + $0x508] sm:$0xff]
  %v349 = vld [vmem:[%s1 + $0x510] sm:$0xff]
  %v350 = vld [vmem:[%s1 + $0x518] sm:$0xff]
  %v351 = vld [vmem:[%s1 + $0x520] sm:$0xff]
  %v352 = vld [vmem:[%s1 + $0x528] sm:$0xff]
  %v353 = vld [vmem:[%s1 + $0x530] sm:$0xff]
  %v354 = vld [vmem:[%s1 + $0x538] sm:$0xff]
  %v355 = vld [vmem:[%s1 + $0x540] sm:$0xff]
  %v356 = vld [vmem:[%s1 + $0x548] sm:$0xff]
  %v357 = vld [vmem:[%s1 + $0x550] sm:$0xff]
  %v358 = vld [vmem:[%s1 + $0x558] sm:$0xff]
  %v359 = vld [vmem:[%s1 + $0x560] sm:$0xff]
  %v360 = vld [vmem:[%s1 + $0x568] sm:$0xff]
  %v361 = vld [vmem:[%s1 + $0x570] sm:$0xff]
  %v362 = vld [vmem:[%s1 + $0x578] sm:$0xff]
  %v363 = vld [vmem:[%s1 + $0x580] sm:$0xff]
  %v364 = vld [vmem:[%s1 + $0x588] sm:$0xff]
  %v365 = vld [vmem:[%s1 + $0x590] sm:$0xff]
  %v366 = vld [vmem:[%s1 + $0x598] sm:$0xff]
  %v367 = vld [vmem:[%s1 + $0x5a0] sm:$0xff]
  %v368 = vld [vmem:[%s1 + $0x5a8] sm:$0xff]
  %v369 = vld [vmem:[%s1 + $0x5b0] sm:$0xff]
  %v370 = vld [vmem:[%s1 + $0x5b8] sm:$0xff]
  %v371 = vld [vmem:[%s1 + $0x5c0] sm:$0xff]
  %v372 = vld [vmem:[%s1 + $0x5c8] sm:$0xff]
  %v373 = vld [vmem:[%s1 + $0x5d0] sm:$0xff]
  %v374 = vld [vmem:[%s1 + $0x5d8] sm:$0xff]
  %v375 = vld [vmem:[%s1 + $0x5e0] sm:$0xff]
  %v376 = vld [vmem:[%s1 + $0x5e8] sm:$0xff]
  %v377 = vld [vmem:[%s1 + $0x5f0] sm:$0xff]
  %v378 = vld [vmem:[%s1 + $0x5f8] sm:$0xff]
  %379 = vmatprep.subr.mxu0 %v218
  %380 = vmatpush1.msra.mxu0 %v217
  %381 = vmatprep.subr.mxu0 %v216
  %382 = vmatpush1.msra.mxu0 %v215
  %383 = vmatprep.subr.mxu0 %v214
  %384 = vmatpush1.msra.mxu0 %v213
  %385 = vmatprep.subr.mxu0 %v212
  %386 = vmatpush1.msra.mxu0 %v211
  %387 = vmatprep.subr.mxu0 %v210
  %388 = vmatpush1.msra.mxu0 %v209
  %389 = vmatprep.subr.mxu0 %v208
  %390 = vmatpush1.msra.mxu0 %v207
  %391 = vmatprep.subr.mxu0 %v206
  %392 = vmatpush1.msra.mxu0 %v205
  %393 = vmatprep.subr.mxu0 %v204
  %394 = vmatpush1.msra.mxu0 %v203
  %395 = vmatprep.subr.mxu0 %v202
  %396 = vmatpush1.msra.mxu0 %v201
  %397 = vmatprep.subr.mxu0 %v200
  %398 = vmatpush1.msra.mxu0 %v199
  %399 = vmatprep.subr.mxu0 %v198
  %400 = vmatpush1.msra.mxu0 %v197
  %401 = vmatprep.subr.mxu0 %v196
  %402 = vmatpush1.msra.mxu0 %v195
  %403 = vmatprep.subr.mxu0 %v194
  %404 = vmatpush1.msra.mxu0 %v193
  %405 = vmatprep.subr.mxu0 %v192
  %406 = vmatpush1.msra.mxu0 %v191
  %407 = vmatprep.subr.mxu0 %v190
  %408 = vmatpush1.msra.mxu0 %v189
  %409 = vmatprep.subr.mxu0 %v188
  %410 = vmatpush1.msra.mxu0 %v187
  %411 = vmatprep.subr.mxu0 %v250
  %412 = vmatpush2.msra.mxu0 %v249
  %413 = vmatprep.subr.mxu0 %v248
  %414 = vmatpush2.msra.mxu0 %v247
  %415 = vmatprep.subr.mxu0 %v246
  %416 = vmatpush2.msra.mxu0 %v245
  %417 = vmatprep.subr.mxu0 %v244
  %418 = vmatpush2.msra.mxu0 %v243
  %419 = vmatprep.subr.mxu0 %v242
  %420 = vmatpush2.msra.mxu0 %v241
  %421 = vmatprep.subr.mxu0 %v240
  %422 = vmatpush2.msra.mxu0 %v239
  %423 = vmatprep.subr.mxu0 %v238
  %424 = vmatpush2.msra.mxu0 %v237
  %425 = vmatprep.subr.mxu0 %v236
  %426 = vmatpush2.msra.mxu0 %v235
  %427 = vmatprep.subr.mxu0 %v234
  %428 = vmatpush2.msra.mxu0 %v233
  %429 = vmatprep.subr.mxu0 %v232
  %430 = vmatpush2.msra.mxu0 %v231
  %431 = vmatprep.subr.mxu0 %v230
  %432 = vmatpush2.msra.mxu0 %v229
  %433 = vmatprep.subr.mxu0 %v228
  %434 = vmatpush2.msra.mxu0 %v227
  %435 = vmatprep.subr.mxu0 %v226
  %436 = vmatpush2.msra.mxu0 %v225
  %437 = vmatprep.subr.mxu0 %v224
  %438 = vmatpush2.msra.mxu0 %v223
  %439 = vmatprep.subr.mxu0 %v222
  %440 = vmatpush2.msra.mxu0 %v221
  %441 = vmatprep.subr.mxu0 %v220
  %442 = vmatpush2.msra.mxu0 %v219
  %443 = vmatprep.mubr.f32.mxu0 %v106
  %444 = vmatmul.mubr.f32.gmra.mxu0 %v105
  %v445 = vpop.f32.mrf.mxu0
  %v446 = vadd.f32 0.0, %v445
  %v447 = vpop.f32.mrf.mxu0
  %v448 = vadd.f32 0.0, %v447
  %449 = vmatprep.mubr.f32.mxu0 %v108
  %450 = vmatmul.mubr.f32.gmra.mxu0 %v107
  %v451 = vpop.f32.mrf.mxu0
  %v452 = vadd.f32 0.0, %v451
  %v453 = vpop.f32.mrf.mxu0
  %v454 = vadd.f32 0.0, %v453
  %455 = vmatprep.mubr.f32.mxu0 %v112
  %456 = vmatmul.mubr.f32.gmra.mxu0 %v111
  %v457 = vpop.f32.mrf.mxu0
  %v458 = vadd.f32 0.0, %v457
  %v459 = vpop.f32.mrf.mxu0
  %v460 = vadd.f32 0.0, %v459
  %461 = vmatprep.mubr.f32.mxu0 %v114
  %462 = vmatmul.mubr.f32.gmra.mxu0 %v113
  %v463 = vpop.f32.mrf.mxu0
  %v464 = vadd.f32 0.0, %v463
  %v465 = vpop.f32.mrf.mxu0
  %v466 = vadd.f32 0.0, %v465
  %467 = vdwg.mxu0
  %468 = vmatprep.subr.mxu0 %v282
  %469 = vmatpush1.msra.mxu0 %v281
  %470 = vmatprep.subr.mxu0 %v280
  %471 = vmatpush1.msra.mxu0 %v279
  %472 = vmatprep.subr.mxu0 %v278
  %473 = vmatpush1.msra.mxu0 %v277
  %474 = vmatprep.subr.mxu0 %v276
  %475 = vmatpush1.msra.mxu0 %v275
  %476 = vmatprep.subr.mxu0 %v274
  %477 = vmatpush1.msra.mxu0 %v273
  %478 = vmatprep.subr.mxu0 %v272
  %479 = vmatpush1.msra.mxu0 %v271
  %480 = vmatprep.subr.mxu0 %v270
  %481 = vmatpush1.msra.mxu0 %v269
  %482 = vmatprep.subr.mxu0 %v268
  %483 = vmatpush1.msra.mxu0 %v267
  %484 = vmatprep.subr.mxu0 %v266
  %485 = vmatpush1.msra.mxu0 %v265
  %486 = vmatprep.subr.mxu0 %v264
  %487 = vmatpush1.msra.mxu0 %v263
  %488 = vmatprep.subr.mxu0 %v262
  %489 = vmatpush1.msra.mxu0 %v261
  %490 = vmatprep.subr.mxu0 %v260
  %491 = vmatpush1.msra.mxu0 %v259
  %492 = vmatprep.subr.mxu0 %v258
  %493 = vmatpush1.msra.mxu0 %v257
  %494 = vmatprep.subr.mxu0 %v256
  %495 = vmatpush1.msra.mxu0 %v255
  %496 = vmatprep.subr.mxu0 %v254
  %497 = vmatpush1.msra.mxu0 %v253
  %498 = vmatprep.subr.mxu0 %v252
  %499 = vmatpush1.msra.mxu0 %v251
  %500 = vmatprep.subr.mxu0 %v314
  %501 = vmatpush2.msra.mxu0 %v313
  %502 = vmatprep.subr.mxu0 %v312
  %503 = vmatpush2.msra.mxu0 %v311
  %504 = vmatprep.subr.mxu0 %v310
  %505 = vmatpush2.msra.mxu0 %v309
  %506 = vmatprep.subr.mxu0 %v308
  %507 = vmatpush2.msra.mxu0 %v307
  %508 = vmatprep.subr.mxu0 %v306
  %509 = vmatpush2.msra.mxu0 %v305
  %510 = vmatprep.subr.mxu0 %v304
  %511 = vmatpush2.msra.mxu0 %v303
  %512 = vmatprep.subr.mxu0 %v302
  %513 = vmatpush2.msra.mxu0 %v301
  %514 = vmatprep.subr.mxu0 %v300
  %515 = vmatpush2.msra.mxu0 %v299
  %516 = vmatprep.subr.mxu0 %v298
  %517 = vmatpush2.msra.mxu0 %v297
  %518 = vmatprep.subr.mxu0 %v296
  %519 = vmatpush2.msra.mxu0 %v295
  %520 = vmatprep.subr.mxu0 %v294
  %521 = vmatpush2.msra.mxu0 %v293
  %522 = vmatprep.subr.mxu0 %v292
  %523 = vmatpush2.msra.mxu0 %v291
  %524 = vmatprep.subr.mxu0 %v290
  %525 = vmatpush2.msra.mxu0 %v289
  %526 = vmatprep.subr.mxu0 %v288
  %527 = vmatpush2.msra.mxu0 %v287
  %528 = vmatprep.subr.mxu0 %v286
  %529 = vmatpush2.msra.mxu0 %v285
  %530 = vmatprep.subr.mxu0 %v284
  %531 = vmatpush2.msra.mxu0 %v283
  %532 = vmatprep.mubr.f32.mxu0 %v135
  %533 = vmatmul.mubr.f32.gmra.mxu0 %v132
  %v534 = vpop.f32.mrf.mxu0
  %v535 = vadd.f32 %v446, %v534
  %v536 = vpop.f32.mrf.mxu0
  %v537 = vadd.f32 %v448, %v536
  %538 = vmatprep.mubr.f32.mxu0 %v139
  %539 = vmatmul.mubr.f32.gmra.mxu0 %v137
  %v540 = vpop.f32.mrf.mxu0
  %v541 = vadd.f32 %v452, %v540
  %v542 = vpop.f32.mrf.mxu0
  %v543 = vadd.f32 %v454, %v542
  %544 = vmatprep.mubr.f32.mxu0 %v145
  %545 = vmatmul.mubr.f32.gmra.mxu0 %v142
  %v546 = vpop.f32.mrf.mxu0
  %v547 = vadd.f32 %v458, %v546
  %v548 = vpop.f32.mrf.mxu0
  %v549 = vadd.f32 %v460, %v548
  %550 = vmatprep.mubr.f32.mxu0 %v149
  %551 = vmatmul.mubr.f32.gmra.mxu0 %v147
  %v552 = vpop.f32.mrf.mxu0
  %v553 = vadd.f32 %v464, %v552
  %v554 = vpop.f32.mrf.mxu0
  %v555 = vadd.f32 %v466, %v554
  %556 = vdwg.mxu0
  %557 = vmatprep.subr.mxu0 %v346
  %558 = vmatpush1.msra.mxu0 %v345
  %559 = vmatprep.subr.mxu0 %v344
  %560 = vmatpush1.msra.mxu0 %v343
  %561 = vmatprep.subr.mxu0 %v342
  %562 = vmatpush1.msra.mxu0 %v341
  %563 = vmatprep.subr.mxu0 %v340
  %564 = vmatpush1.msra.mxu0 %v339
  %565 = vmatprep.subr.mxu0 %v338
  %566 = vmatpush1.msra.mxu0 %v337
  %567 = vmatprep.subr.mxu0 %v336
  %568 = vmatpush1.msra.mxu0 %v335
  %569 = vmatprep.subr.mxu0 %v334
  %570 = vmatpush1.msra.mxu0 %v333
  %571 = vmatprep.subr.mxu0 %v332
  %572 = vmatpush1.msra.mxu0 %v331
  %573 = vmatprep.subr.mxu0 %v330
  %574 = vmatpush1.msra.mxu0 %v329
  %575 = vmatprep.subr.mxu0 %v328
  %576 = vmatpush1.msra.mxu0 %v327
  %577 = vmatprep.subr.mxu0 %v326
  %578 = vmatpush1.msra.mxu0 %v325
  %579 = vmatprep.subr.mxu0 %v324
  %580 = vmatpush1.msra.mxu0 %v323
  %581 = vmatprep.subr.mxu0 %v322
  %582 = vmatpush1.msra.mxu0 %v321
  %583 = vmatprep.subr.mxu0 %v320
  %584 = vmatpush1.msra.mxu0 %v319
  %585 = vmatprep.subr.mxu0 %v318
  %586 = vmatpush1.msra.mxu0 %v317
  %587 = vmatprep.subr.mxu0 %v316
  %588 = vmatpush1.msra.mxu0 %v315
  %589 = vmatprep.subr.mxu0 %v378
  %590 = vmatpush2.msra.mxu0 %v377
  %591 = vmatprep.subr.mxu0 %v376
  %592 = vmatpush2.msra.mxu0 %v375
  %593 = vmatprep.subr.mxu0 %v374
  %594 = vmatpush2.msra.mxu0 %v373
  %595 = vmatprep.subr.mxu0 %v372
  %596 = vmatpush2.msra.mxu0 %v371
  %597 = vmatprep.subr.mxu0 %v370
  %598 = vmatpush2.msra.mxu0 %v369
  %599 = vmatprep.subr.mxu0 %v368
  %600 = vmatpush2.msra.mxu0 %v367
  %601 = vmatprep.subr.mxu0 %v366
  %602 = vmatpush2.msra.mxu0 %v365
  %603 = vmatprep.subr.mxu0 %v364
  %604 = vmatpush2.msra.mxu0 %v363
  %605 = vmatprep.subr.mxu0 %v362
  %606 = vmatpush2.msra.mxu0 %v361
  %607 = vmatprep.subr.mxu0 %v360
  %608 = vmatpush2.msra.mxu0 %v359
  %609 = vmatprep.subr.mxu0 %v358
  %610 = vmatpush2.msra.mxu0 %v357
  %611 = vmatprep.subr.mxu0 %v356
  %612 = vmatpush2.msra.mxu0 %v355
  %613 = vmatprep.subr.mxu0 %v354
  %614 = vmatpush2.msra.mxu0 %v353
  %615 = vmatprep.subr.mxu0 %v352
  %616 = vmatpush2.msra.mxu0 %v351
  %617 = vmatprep.subr.mxu0 %v350
  %618 = vmatpush2.msra.mxu0 %v349
  %619 = vmatprep.subr.mxu0 %v348
  %620 = vmatpush2.msra.mxu0 %v347
  %621 = vmatprep.mubr.f32.mxu0 %v164
  %622 = vmatmul.mubr.f32.gmra.mxu0 %v161
  %v623 = vpop.f32.mrf.mxu0
  %v624 = vadd.f32 %v535, %v623
  %v625 = vpop.f32.mrf.mxu0
  %v626 = vadd.f32 %v537, %v625
  %627 = vmatprep.mubr.f32.mxu0 %v168
  %628 = vmatmul.mubr.f32.gmra.mxu0 %v166
  %v629 = vpop.f32.mrf.mxu0
  %v630 = vadd.f32 %v541, %v629
  %v631 = vpop.f32.mrf.mxu0
  %v632 = vadd.f32 %v543, %v631
  %633 = vmatprep.mubr.f32.mxu0 %v174
  %634 = vmatmul.mubr.f32.gmra.mxu0 %v171
  %v635 = vpop.f32.mrf.mxu0
  %v636 = vadd.f32 %v547, %v635
  %v637 = vpop.f32.mrf.mxu0
  %v638 = vadd.f32 %v549, %v637
  %639 = vmatprep.mubr.f32.mxu0 %v178
  %640 = vmatmul.mubr.f32.gmra.mxu0 %v176
  %v641 = vpop.f32.mrf.mxu0
  %v642 = vadd.f32 %v553, %v641
  %v643 = vpop.f32.mrf.mxu0
  %v644 = vadd.f32 %v555, %v643
  %645 = vdwg.mxu0
  %v646 = vadd.f32 %v624, %v630
  %v647 = vadd.f32 %v646, %v636
  %v648 = vadd.f32 %v647, %v642
  %v649 = vrot.slane %v648, 4
  %v650 = vadd.f32 %v648, %v649
  %v651 = vrot.slane %v650, 2
  %v652 = vadd.f32 %v650, %v651
  %v653 = vrot.slane %v652, 1
  %v654 = vadd.f32 %v652, %v653
  %v655 = vadd.f32 %v626, %v632
  %v656 = vadd.f32 %v655, %v638
  %v657 = vadd.f32 %v656, %v644
  %v658 = vrot.slane %v657, 4
  %v659 = vadd.f32 %v657, %v658
  %v660 = vrot.slane %v659, 2
  %v661 = vadd.f32 %v659, %v660
  %v662 = vrot.slane %v661, 1
  %v663 = vadd.f32 %v661, %v662
  %v664 = vmul.f32 %v624, %v624
  %v665 = vmul.f32 %v626, %v626
  %v666 = vmul.f32 %v630, %v630
  %v667 = vmul.f32 %v632, %v632
  %v668 = vmul.f32 %v636, %v636
  %v669 = vmul.f32 %v638, %v638
  %v670 = vmul.f32 %v642, %v642
  %v671 = vmul.f32 %v644, %v644
  %v672 = vadd.f32 %v664, %v666
  %v673 = vadd.f32 %v672, %v668
  %v674 = vadd.f32 %v673, %v670
  %v675 = vrot.slane %v674, 4
  %v676 = vadd.f32 %v674, %v675
  %v677 = vrot.slane %v676, 2
  %v678 = vadd.f32 %v676, %v677
  %v679 = vrot.slane %v678, 1
  %v680 = vadd.f32 %v678, %v679
  %v681 = vadd.f32 %v665, %v667
  %v682 = vadd.f32 %v681, %v669
  %v683 = vadd.f32 %v682, %v671
  %v684 = vrot.slane %v683, 4
  %v685 = vadd.f32 %v683, %v684
  %v686 = vrot.slane %v685, 2
  %v687 = vadd.f32 %v685, %v686
  %v688 = vrot.slane %v687, 1
  %v689 = vadd.f32 %v687, %v688
  %v690 = vld [vmem:[%s2] sm:$0xff]
  %v691 = vld [vmem:[%s2 + $0x8] sm:$0xff]
  %v692 = vld [vmem:[%s2 + $0x10] sm:$0xff]
  %v693 = vld [vmem:[%s2 + $0x18] sm:$0xff]
  %v694 = vld [vmem:[%s2 + $0x20] sm:$0xff]
  %v695 = vld [vmem:[%s2 + $0x28] sm:$0xff]
  %v696 = vld [vmem:[%s2 + $0x30] sm:$0xff]
  %v697 = vld [vmem:[%s2 + $0x38] sm:$0xff]
  %v698 = vld [vmem:[%s2 + $0x40] sm:$0xff]
  %v699 = vld [vmem:[%s2 + $0x48] sm:$0xff]
  %v700 = vld [vmem:[%s2 + $0x50] sm:$0xff]
  %v701 = vld [vmem:[%s2 + $0x58] sm:$0xff]
  %v702 = vld [vmem:[%s2 + $0x60] sm:$0xff]
  %v703 = vld [vmem:[%s2 + $0x68] sm:$0xff]
  %v704 = vld [vmem:[%s2 + $0x70] sm:$0xff]
  %v705 = vld [vmem:[%s2 + $0x78] sm:$0xff]
  %v706 = vld [vmem:[%s2 + $0x80] sm:$0xff]
  %v707 = vld [vmem:[%s2 + $0x88] sm:$0xff]
  %v708 = vld [vmem:[%s2 + $0x90] sm:$0xff]
  %v709 = vld [vmem:[%s2 + $0x98] sm:$0xff]
  %v710 = vld [vmem:[%s2 + $0xa0] sm:$0xff]
  %v711 = vld [vmem:[%s2 + $0xa8] sm:$0xff]
  %v712 = vld [vmem:[%s2 + $0xb0] sm:$0xff]
  %v713 = vld [vmem:[%s2 + $0xb8] sm:$0xff]
  %v714 = vld [vmem:[%s2 + $0xc0] sm:$0xff]
  %v715 = vld [vmem:[%s2 + $0xc8] sm:$0xff]
  %v716 = vld [vmem:[%s2 + $0xd0] sm:$0xff]
  %v717 = vld [vmem:[%s2 + $0xd8] sm:$0xff]
  %v718 = vld [vmem:[%s2 + $0xe0] sm:$0xff]
  %v719 = vld [vmem:[%s2 + $0xe8] sm:$0xff]
  %v720 = vld [vmem:[%s2 + $0xf0] sm:$0xff]
  %v721 = vld [vmem:[%s2 + $0xf8] sm:$0xff]
  %722 = vmatprep.subr.mxu0 0.0
  %723 = vmatpush1.msra.mxu0 %v705
  %724 = vmatprep.subr.mxu0 0.0
  %725 = vmatpush1.msra.mxu0 %v704
  %726 = vmatprep.subr.mxu0 0.0
  %727 = vmatpush1.msra.mxu0 %v703
  %728 = vmatprep.subr.mxu0 0.0
  %729 = vmatpush1.msra.mxu0 %v702
  %730 = vmatprep.subr.mxu0 0.0
  %731 = vmatpush1.msra.mxu0 %v701
  %732 = vmatprep.subr.mxu0 0.0
  %733 = vmatpush1.msra.mxu0 %v700
  %734 = vmatprep.subr.mxu0 0.0
  %735 = vmatpush1.msra.mxu0 %v699
  %736 = vmatprep.subr.mxu0 0.0
  %737 = vmatpush1.msra.mxu0 %v698
  %738 = vmatprep.subr.mxu0 0.0
  %739 = vmatpush1.msra.mxu0 %v697
  %740 = vmatprep.subr.mxu0 0.0
  %741 = vmatpush1.msra.mxu0 %v696
  %742 = vmatprep.subr.mxu0 0.0
  %743 = vmatpush1.msra.mxu0 %v695
  %744 = vmatprep.subr.mxu0 0.0
  %745 = vmatpush1.msra.mxu0 %v694
  %746 = vmatprep.subr.mxu0 0.0
  %747 = vmatpush1.msra.mxu0 %v693
  %748 = vmatprep.subr.mxu0 0.0
  %749 = vmatpush1.msra.mxu0 %v692
  %750 = vmatprep.subr.mxu0 0.0
  %751 = vmatpush1.msra.mxu0 %v691
  %752 = vmatprep.subr.mxu0 0.0
  %753 = vmatpush1.msra.mxu0 %v690
  %754 = vmatprep.subr.mxu0 0.0
  %755 = vmatpush2.msra.mxu0 %v721
  %756 = vmatprep.subr.mxu0 0.0
  %757 = vmatpush2.msra.mxu0 %v720
  %758 = vmatprep.subr.mxu0 0.0
  %759 = vmatpush2.msra.mxu0 %v719
  %760 = vmatprep.subr.mxu0 0.0
  %761 = vmatpush2.msra.mxu0 %v718
  %762 = vmatprep.subr.mxu0 0.0
  %763 = vmatpush2.msra.mxu0 %v717
  %764 = vmatprep.subr.mxu0 0.0
  %765 = vmatpush2.msra.mxu0 %v716
  %766 = vmatprep.subr.mxu0 0.0
  %767 = vmatpush2.msra.mxu0 %v715
  %768 = vmatprep.subr.mxu0 0.0
  %769 = vmatpush2.msra.mxu0 %v714
  %770 = vmatprep.subr.mxu0 0.0
  %771 = vmatpush2.msra.mxu0 %v713
  %772 = vmatprep.subr.mxu0 0.0
  %773 = vmatpush2.msra.mxu0 %v712
  %774 = vmatprep.subr.mxu0 0.0
  %775 = vmatpush2.msra.mxu0 %v711
  %776 = vmatprep.subr.mxu0 0.0
  %777 = vmatpush2.msra.mxu0 %v710
  %778 = vmatprep.subr.mxu0 0.0
  %779 = vmatpush2.msra.mxu0 %v709
  %780 = vmatprep.subr.mxu0 0.0
  %781 = vmatpush2.msra.mxu0 %v708
  %782 = vmatprep.subr.mxu0 0.0
  %783 = vmatpush2.msra.mxu0 %v707
  %784 = vmatprep.subr.mxu0 0.0
  %785 = vmatpush2.msra.mxu0 %v706
  %786 = vmatprep.mubr.f32.mxu0 %v663
  %787 = vmatmul.mubr.f32.gmra.mxu0 %v654
  %v788 = vpop.f32.mrf.mxu0
  %v789 = vadd.f32 0.0, %v788
  %v790 = vpop.f32.mrf.mxu0
  %791 = vdwg.mxu0
  %792 = vmatprep.subr.mxu0 0.0
  %793 = vmatpush1.msra.mxu0 %v705
  %794 = vmatprep.subr.mxu0 0.0
  %795 = vmatpush1.msra.mxu0 %v704
  %796 = vmatprep.subr.mxu0 0.0
  %797 = vmatpush1.msra.mxu0 %v703
  %798 = vmatprep.subr.mxu0 0.0
  %799 = vmatpush1.msra.mxu0 %v702
  %800 = vmatprep.subr.mxu0 0.0
  %801 = vmatpush1.msra.mxu0 %v701
  %802 = vmatprep.subr.mxu0 0.0
  %803 = vmatpush1.msra.mxu0 %v700
  %804 = vmatprep.subr.mxu0 0.0
  %805 = vmatpush1.msra.mxu0 %v699
  %806 = vmatprep.subr.mxu0 0.0
  %807 = vmatpush1.msra.mxu0 %v698
  %808 = vmatprep.subr.mxu0 0.0
  %809 = vmatpush1.msra.mxu0 %v697
  %810 = vmatprep.subr.mxu0 0.0
  %811 = vmatpush1.msra.mxu0 %v696
  %812 = vmatprep.subr.mxu0 0.0
  %813 = vmatpush1.msra.mxu0 %v695
  %814 = vmatprep.subr.mxu0 0.0
  %815 = vmatpush1.msra.mxu0 %v694
  %816 = vmatprep.subr.mxu0 0.0
  %817 = vmatpush1.msra.mxu0 %v693
  %818 = vmatprep.subr.mxu0 0.0
  %819 = vmatpush1.msra.mxu0 %v692
  %820 = vmatprep.subr.mxu0 0.0
  %821 = vmatpush1.msra.mxu0 %v691
  %822 = vmatprep.subr.mxu0 0.0
  %823 = vmatpush1.msra.mxu0 %v690
  %824 = vmatprep.subr.mxu0 0.0
  %825 = vmatpush2.msra.mxu0 %v721
  %826 = vmatprep.subr.mxu0 0.0
  %827 = vmatpush2.msra.mxu0 %v720
  %828 = vmatprep.subr.mxu0 0.0
  %829 = vmatpush2.msra.mxu0 %v719
  %830 = vmatprep.subr.mxu0 0.0
  %831 = vmatpush2.msra.mxu0 %v718
  %832 = vmatprep.subr.mxu0 0.0
  %833 = vmatpush2.msra.mxu0 %v717
  %834 = vmatprep.subr.mxu0 0.0
  %835 = vmatpush2.msra.mxu0 %v716
  %836 = vmatprep.subr.mxu0 0.0
  %837 = vmatpush2.msra.mxu0 %v715
  %838 = vmatprep.subr.mxu0 0.0
  %839 = vmatpush2.msra.mxu0 %v714
  %840 = vmatprep.subr.mxu0 0.0
  %841 = vmatpush2.msra.mxu0 %v713
  %842 = vmatprep.subr.mxu0 0.0
  %843 = vmatpush2.msra.mxu0 %v712
  %844 = vmatprep.subr.mxu0 0.0
  %845 = vmatpush2.msra.mxu0 %v711
  %846 = vmatprep.subr.mxu0 0.0
  %847 = vmatpush2.msra.mxu0 %v710
  %848 = vmatprep.subr.mxu0 0.0
  %849 = vmatpush2.msra.mxu0 %v709
  %850 = vmatprep.subr.mxu0 0.0
  %851 = vmatpush2.msra.mxu0 %v708
  %852 = vmatprep.subr.mxu0 0.0
  %853 = vmatpush2.msra.mxu0 %v707
  %854 = vmatprep.subr.mxu0 0.0
  %855 = vmatpush2.msra.mxu0 %v706
  %856 = vmatprep.mubr.f32.mxu0 %v689
  %857 = vmatmul.mubr.f32.gmra.mxu0 %v680
  %v858 = vpop.f32.mrf.mxu0
  %v859 = vadd.f32 0.0, %v858
  %v860 = vpop.f32.mrf.mxu0
  %861 = vdwg.mxu0
  %v862 = vmul.f32 %v789, 0.001953125
  %v863 = vmul.f32 %v859, 0.001953125
  %v864 = vmul.f32 %v862, %v862
  %v865 = vsub.f32 %v863, %v864
  %v866 = vld [vmem:[%s4] sm:$0x1]
  %v867 = vadd.f32 %v865, 1e-05
  %v868 = vrsqrt.pop %v867
  %v869 = vmul.f32 %v866, %v868
  %v870 = vld [vmem:[%s5] sm:$0x1]
  %v871 = vmul.f32 %v862, %v869
  %v872 = vsub.f32 %v870, %v871
  %v873 = vld [vmem:[%s3] sm:$0xff]
  %v874 = vld [vmem:[%s3 + $0x8] sm:$0xff]
  %v875 = vld [vmem:[%s3 + $0x10] sm:$0xff]
  %v876 = vld [vmem:[%s3 + $0x18] sm:$0xff]
  %vm877 = vcmask 130048
  %v879 = vsel %vm877, %v869, 0
  %881 = vmatprep.subr.mxu0 0.0
  %882 = vmatpush1.msra.mxu0 0.0
  %883 = vmatprep.subr.mxu0 0.0
  %884 = vmatpush1.msra.mxu0 0.0
  %885 = vmatprep.subr.mxu0 0.0
  %886 = vmatpush1.msra.mxu0 0.0
  %887 = vmatprep.subr.mxu0 0.0
  %888 = vmatpush1.msra.mxu0 0.0
  %889 = vmatprep.subr.mxu0 0.0
  %890 = vmatpush1.msra.mxu0 0.0
  %891 = vmatprep.subr.mxu0 0.0
  %892 = vmatpush1.msra.mxu0 0.0
  %893 = vmatprep.subr.mxu0 0.0
  %894 = vmatpush1.msra.mxu0 0.0
  %895 = vmatprep.subr.mxu0 0.0
  %896 = vmatpush1.msra.mxu0 0.0
  %897 = vmatprep.subr.mxu0 0.0
  %898 = vmatpush1.msra.mxu0 0.0
  %899 = vmatprep.subr.mxu0 0.0
  %900 = vmatpush1.msra.mxu0 0.0
  %901 = vmatprep.subr.mxu0 0.0
  %902 = vmatpush1.msra.mxu0 0.0
  %903 = vmatprep.subr.mxu0 0.0
  %904 = vmatpush1.msra.mxu0 0.0
  %905 = vmatprep.subr.mxu0 0.0
  %906 = vmatpush1.msra.mxu0 0.0
  %907 = vmatprep.subr.mxu0 0.0
  %908 = vmatpush1.msra.mxu0 0.0
  %909 = vmatprep.subr.mxu0 %v876
  %910 = vmatpush1.msra.mxu0 %v875
  %911 = vmatprep.subr.mxu0 %v874
  %912 = vmatpush1.msra.mxu0 %v873
  %913 = vmatprep.subr.mxu0 0.0
  %914 = vmatpush2.msra.mxu0 0.0
  %915 = vmatprep.subr.mxu0 0.0
  %916 = vmatpush2.msra.mxu0 0.0
  %917 = vmatprep.subr.mxu0 0.0
  %918 = vmatpush2.msra.mxu0 0.0
  %919 = vmatprep.subr.mxu0 0.0
  %920 = vmatpush2.msra.mxu0 0.0
  %921 = vmatprep.subr.mxu0 0.0
  %922 = vmatpush2.msra.mxu0 0.0
  %923 = vmatprep.subr.mxu0 0.0
  %924 = vmatpush2.msra.mxu0 0.0
  %925 = vmatprep.subr.mxu0 0.0
  %926 = vmatpush2.msra.mxu0 0.0
  %927 = vmatprep.subr.mxu0 0.0
  %928 = vmatpush2.msra.mxu0 0.0
  %929 = vmatprep.subr.mxu0 0.0
  %930 = vmatpush2.msra.mxu0 0.0
  %931 = vmatprep.subr.mxu0 0.0
  %932 = vmatpush2.msra.mxu0 0.0
  %933 = vmatprep.subr.mxu0 0.0
  %934 = vmatpush2.msra.mxu0 0.0
  %935 = vmatprep.subr.mxu0 0.0
  %936 = vmatpush2.msra.mxu0 0.0
  %937 = vmatprep.subr.mxu0 0.0
  %938 = vmatpush2.msra.mxu0 0.0
  %939 = vmatprep.subr.mxu0 0.0
  %940 = vmatpush2.msra.mxu0 0.0
  %941 = vmatprep.subr.mxu0 0.0
  %942 = vmatpush2.msra.mxu0 0.0
  %943 = vmatprep.subr.mxu0 0.0
  %944 = vmatpush2.msra.mxu0 0.0
  %945 = vmatprep.mubr.f32.mxu0 0.0
  %946 = vmatmul.mubr.f32.gmra.mxu0 %v879
  %v947 = vpop.f32.mrf.mxu0
  %v948 = vadd.f32 0.0, %v947
  %v949 = vpop.f32.mrf.mxu0
  %v950 = vadd.f32 0.0, %v949
  %951 = vdwg.mxu0
  %v953 = vsel %vm877, %v872, 0
  %955 = vmatprep.subr.mxu0 0.0
  %956 = vmatpush1.msra.mxu0 0.0
  %957 = vmatprep.subr.mxu0 0.0
  %958 = vmatpush1.msra.mxu0 0.0
  %959 = vmatprep.subr.mxu0 0.0
  %960 = vmatpush1.msra.mxu0 0.0
  %961 = vmatprep.subr.mxu0 0.0
  %962 = vmatpush1.msra.mxu0 0.0
  %963 = vmatprep.subr.mxu0 0.0
  %964 = vmatpush1.msra.mxu0 0.0
  %965 = vmatprep.subr.mxu0 0.0
  %966 = vmatpush1.msra.mxu0 0.0
  %967 = vmatprep.subr.mxu0 0.0
  %968 = vmatpush1.msra.mxu0 0.0
  %969 = vmatprep.subr.mxu0 0.0
  %970 = vmatpush1.msra.mxu0 0.0
  %971 = vmatprep.subr.mxu0 0.0
  %972 = vmatpush1.msra.mxu0 0.0
  %973 = vmatprep.subr.mxu0 0.0
  %974 = vmatpush1.msra.mxu0 0.0
  %975 = vmatprep.subr.mxu0 0.0
  %976 = vmatpush1.msra.mxu0 0.0
  %977 = vmatprep.subr.mxu0 0.0
  %978 = vmatpush1.msra.mxu0 0.0
  %979 = vmatprep.subr.mxu0 0.0
  %980 = vmatpush1.msra.mxu0 0.0
  %981 = vmatprep.subr.mxu0 0.0
  %982 = vmatpush1.msra.mxu0 0.0
  %983 = vmatprep.subr.mxu0 %v876
  %984 = vmatpush1.msra.mxu0 %v875
  %985 = vmatprep.subr.mxu0 %v874
  %986 = vmatpush1.msra.mxu0 %v873
  %987 = vmatprep.subr.mxu0 0.0
  %988 = vmatpush2.msra.mxu0 0.0
  %989 = vmatprep.subr.mxu0 0.0
  %990 = vmatpush2.msra.mxu0 0.0
  %991 = vmatprep.subr.mxu0 0.0
  %992 = vmatpush2.msra.mxu0 0.0
  %993 = vmatprep.subr.mxu0 0.0
  %994 = vmatpush2.msra.mxu0 0.0
  %995 = vmatprep.subr.mxu0 0.0
  %996 = vmatpush2.msra.mxu0 0.0
  %997 = vmatprep.subr.mxu0 0.0
  %998 = vmatpush2.msra.mxu0 0.0
  %999 = vmatprep.subr.mxu0 0.0
  %1000 = vmatpush2.msra.mxu0 0.0
  %1001 = vmatprep.subr.mxu0 0.0
  %1002 = vmatpush2.msra.mxu0 0.0
  %1003 = vmatprep.subr.mxu0 0.0
  %1004 = vmatpush2.msra.mxu0 0.0
  %1005 = vmatprep.subr.mxu0 0.0
  %1006 = vmatpush2.msra.mxu0 0.0
  %1007 = vmatprep.subr.mxu0 0.0
  %1008 = vmatpush2.msra.mxu0 0.0
  %1009 = vmatprep.subr.mxu0 0.0
  %1010 = vmatpush2.msra.mxu0 0.0
  %1011 = vmatprep.subr.mxu0 0.0
  %1012 = vmatpush2.msra.mxu0 0.0
  %1013 = vmatprep.subr.mxu0 0.0
  %1014 = vmatpush2.msra.mxu0 0.0
  %1015 = vmatprep.subr.mxu0 0.0
  %1016 = vmatpush2.msra.mxu0 0.0
  %1017 = vmatprep.subr.mxu0 0.0
  %1018 = vmatpush2.msra.mxu0 0.0
  %1019 = vmatprep.mubr.f32.mxu0 0.0
  %1020 = vmatmul.mubr.f32.gmra.mxu0 %v953
  %v1021 = vpop.f32.mrf.mxu0
  %v1022 = vadd.f32 0.0, %v1021
  %v1023 = vpop.f32.mrf.mxu0
  %v1024 = vadd.f32 0.0, %v1023
  %1025 = vdwg.mxu0
  %v1026 = vlaneseq
  %v1027 = vshrl.u32 %v1026, 7
  %v1028 = vsub.s32 0, %v1027
  %v1029 = vrot.slane %v948, %v1028
  %v1030 = vlaneseq
  %v1031 = vshrl.u32 %v1030, 7
  %v1032 = vsub.s32 0, %v1031
  %v1033 = vrot.slane %v950, %v1032
  %v1034 = vmul.f32 %v624, %v1029
  %v1035 = vmul.f32 %v626, %v1033
  %v1036 = vmul.f32 %v630, %v1029
  %v1037 = vmul.f32 %v632, %v1033
  %v1038 = vmul.f32 %v636, %v1029
  %v1039 = vmul.f32 %v638, %v1033
  %v1040 = vmul.f32 %v642, %v1029
  %v1041 = vmul.f32 %v644, %v1033
  %v1042 = vlaneseq
  %v1043 = vshrl.u32 %v1042, 7
  %v1044 = vsub.s32 0, %v1043
  %v1045 = vrot.slane %v1022, %v1044
  %v1046 = vlaneseq
  %v1047 = vshrl.u32 %v1046, 7
  %v1048 = vsub.s32 0, %v1047
  %v1049 = vrot.slane %v1024, %v1048
  %v1050 = vadd.f32 %v1034, %v1045
  %v1051 = vadd.f32 %v1035, %v1049
  %v1052 = vadd.f32 %v1036, %v1045
  %v1053 = vadd.f32 %v1037, %v1049
  %v1054 = vadd.f32 %v1038, %v1045
  %v1055 = vadd.f32 %v1039, %v1049
  %v1056 = vadd.f32 %v1040, %v1045
  %v1057 = vadd.f32 %v1041, %v1049
  %v1058 = vxor.u32 %v1050, 2147483648
  %v1059 = vxor.u32 %v1051, 2147483648
  %v1060 = vxor.u32 %v1052, 2147483648
  %v1061 = vxor.u32 %v1053, 2147483648
  %v1062 = vxor.u32 %v1054, 2147483648
  %v1063 = vxor.u32 %v1055, 2147483648
  %v1064 = vxor.u32 %v1056, 2147483648
  %v1065 = vxor.u32 %v1057, 2147483648
  %v1066 = vmul.f32 %v1058, 1.442695
  %v1067 = vpow.pop %v1066
  %v1068 = vmul.f32 %v1059, 1.442695
  %v1069 = vpow.pop %v1068
  %v1070 = vmul.f32 %v1060, 1.442695
  %v1071 = vpow.pop %v1070
  %v1072 = vmul.f32 %v1061, 1.442695
  %v1073 = vpow.pop %v1072
  %v1074 = vmul.f32 %v1062, 1.442695
  %v1075 = vpow.pop %v1074
  %v1076 = vmul.f32 %v1063, 1.442695
  %v1077 = vpow.pop %v1076
  %v1078 = vmul.f32 %v1064, 1.442695
  %v1079 = vpow.pop %v1078
  %v1080 = vmul.f32 %v1065, 1.442695
  %v1081 = vpow.pop %v1080
  %v1082 = vadd.f32 %v1067, 1.0
  %v1083 = vadd.f32 %v1069, 1.0
  %v1084 = vadd.f32 %v1071, 1.0
  %v1085 = vadd.f32 %v1073, 1.0
  %v1086 = vadd.f32 %v1075, 1.0
  %v1087 = vadd.f32 %v1077, 1.0
  %v1088 = vadd.f32 %v1079, 1.0
  %v1089 = vadd.f32 %v1081, 1.0
  %v1090 = vrcp.pop %v1082
  %v1091 = vmul.f32 1.0, %v1090
  %v1092 = vrcp.pop %v1083
  %v1093 = vmul.f32 1.0, %v1092
  %v1094 = vrcp.pop %v1084
  %v1095 = vmul.f32 1.0, %v1094
  %v1096 = vrcp.pop %v1085
  %v1097 = vmul.f32 1.0, %v1096
  %v1098 = vrcp.pop %v1086
  %v1099 = vmul.f32 1.0, %v1098
  %v1100 = vrcp.pop %v1087
  %v1101 = vmul.f32 1.0, %v1100
  %v1102 = vrcp.pop %v1088
  %v1103 = vmul.f32 1.0, %v1102
  %v1104 = vrcp.pop %v1089
  %v1105 = vmul.f32 1.0, %v1104
  %v1106 = vadd.f32 %v40, %v42
  %v1107 = vrot.slane %v1106, 4
  %v1108 = vadd.f32 %v1106, %v1107
  %v1109 = vrot.slane %v1108, 2
  %v1110 = vadd.f32 %v1108, %v1109
  %v1111 = vrot.slane %v1110, 1
  %v1112 = vadd.f32 %v1110, %v1111
  %v1113 = vadd.f32 %v41, %v43
  %v1114 = vrot.slane %v1113, 4
  %v1115 = vadd.f32 %v1113, %v1114
  %v1116 = vrot.slane %v1115, 2
  %v1117 = vadd.f32 %v1115, %v1116
  %v1118 = vrot.slane %v1117, 1
  %v1119 = vadd.f32 %v1117, %v1118
  %v1120 = vadd.f32 %v44, %v46
  %v1121 = vrot.slane %v1120, 4
  %v1122 = vadd.f32 %v1120, %v1121
  %v1123 = vrot.slane %v1122, 2
  %v1124 = vadd.f32 %v1122, %v1123
  %v1125 = vrot.slane %v1124, 1
  %v1126 = vadd.f32 %v1124, %v1125
  %v1127 = vadd.f32 %v45, %v47
  %v1128 = vrot.slane %v1127, 4
  %v1129 = vadd.f32 %v1127, %v1128
  %v1130 = vrot.slane %v1129, 2
  %v1131 = vadd.f32 %v1129, %v1130
  %v1132 = vrot.slane %v1131, 1
  %v1133 = vadd.f32 %v1131, %v1132
  %vm1138 = vcmask 1041409
  %v1139 = vsel %vm1138, %v1126, %v1112
  %v1140 = vsel %vm1138, %v1133, %v1119
  %1143 = vmatprep.subr.mxu0 0.0
  %1144 = vmatpush1.msra.mxu0 %v705
  %1145 = vmatprep.subr.mxu0 0.0
  %1146 = vmatpush1.msra.mxu0 %v704
  %1147 = vmatprep.subr.mxu0 0.0
  %1148 = vmatpush1.msra.mxu0 %v703
  %1149 = vmatprep.subr.mxu0 0.0
  %1150 = vmatpush1.msra.mxu0 %v702
  %1151 = vmatprep.subr.mxu0 0.0
  %1152 = vmatpush1.msra.mxu0 %v701
  %1153 = vmatprep.subr.mxu0 0.0
  %1154 = vmatpush1.msra.mxu0 %v700
  %1155 = vmatprep.subr.mxu0 0.0
  %1156 = vmatpush1.msra.mxu0 %v699
  %1157 = vmatprep.subr.mxu0 0.0
  %1158 = vmatpush1.msra.mxu0 %v698
  %1159 = vmatprep.subr.mxu0 0.0
  %1160 = vmatpush1.msra.mxu0 %v697
  %1161 = vmatprep.subr.mxu0 0.0
  %1162 = vmatpush1.msra.mxu0 %v696
  %1163 = vmatprep.subr.mxu0 0.0
  %1164 = vmatpush1.msra.mxu0 %v695
  %1165 = vmatprep.subr.mxu0 0.0
  %1166 = vmatpush1.msra.mxu0 %v694
  %1167 = vmatprep.subr.mxu0 0.0
  %1168 = vmatpush1.msra.mxu0 %v693
  %1169 = vmatprep.subr.mxu0 0.0
  %1170 = vmatpush1.msra.mxu0 %v692
  %1171 = vmatprep.subr.mxu0 0.0
  %1172 = vmatpush1.msra.mxu0 %v691
  %1173 = vmatprep.subr.mxu0 0.0
  %1174 = vmatpush1.msra.mxu0 %v690
  %1175 = vmatprep.subr.mxu0 0.0
  %1176 = vmatpush2.msra.mxu0 %v721
  %1177 = vmatprep.subr.mxu0 0.0
  %1178 = vmatpush2.msra.mxu0 %v720
  %1179 = vmatprep.subr.mxu0 0.0
  %1180 = vmatpush2.msra.mxu0 %v719
  %1181 = vmatprep.subr.mxu0 0.0
  %1182 = vmatpush2.msra.mxu0 %v718
  %1183 = vmatprep.subr.mxu0 0.0
  %1184 = vmatpush2.msra.mxu0 %v717
  %1185 = vmatprep.subr.mxu0 0.0
  %1186 = vmatpush2.msra.mxu0 %v716
  %1187 = vmatprep.subr.mxu0 0.0
  %1188 = vmatpush2.msra.mxu0 %v715
  %1189 = vmatprep.subr.mxu0 0.0
  %1190 = vmatpush2.msra.mxu0 %v714
  %1191 = vmatprep.subr.mxu0 0.0
  %1192 = vmatpush2.msra.mxu0 %v713
  %1193 = vmatprep.subr.mxu0 0.0
  %1194 = vmatpush2.msra.mxu0 %v712
  %1195 = vmatprep.subr.mxu0 0.0
  %1196 = vmatpush2.msra.mxu0 %v711
  %1197 = vmatprep.subr.mxu0 0.0
  %1198 = vmatpush2.msra.mxu0 %v710
  %1199 = vmatprep.subr.mxu0 0.0
  %1200 = vmatpush2.msra.mxu0 %v709
  %1201 = vmatprep.subr.mxu0 0.0
  %1202 = vmatpush2.msra.mxu0 %v708
  %1203 = vmatprep.subr.mxu0 0.0
  %1204 = vmatpush2.msra.mxu0 %v707
  %1205 = vmatprep.subr.mxu0 0.0
  %1206 = vmatpush2.msra.mxu0 %v706
  %1207 = vmatprep.mubr.f32.mxu0 %v1140
  %1208 = vmatmul.mubr.f32.gmra.mxu0 %v1139
  %v1209 = vpop.f32.mrf.mxu0
  %v1210 = vadd.f32 0.0, %v1209
  %v1211 = vpop.f32.mrf.mxu0
  %1212 = vdwg.mxu0
  %v1213 = vmul.f32 %v1210, 0.00390625
  %v1216 = vunpack.c.l.s4 1966171168
  %v1217 = vunpack.c.0.s8 %v1216
  %v1218 = vlaneseq
  %v1219 = vshrl.u32 %v1218, 7
  %v1220 = vsub.s32 %v1217, %v1219
  %v1221 = vrot.slane %v1213, %v1220
  %v1222 = vcombine.high %v1221, %v1221
  %v1224 = vunpack.c.l.s4 1966171168
  %v1225 = vunpack.c.0.s8 %v1224
  %v1226 = vlaneseq
  %v1227 = vshrl.u32 %v1226, 7
  %v1228 = vsub.s32 %v1225, %v1227
  %v1229 = vrot.slane %v1221, %v1228
  %v1231 = vunpack.c.l.s4 1966171168
  %v1232 = vunpack.c.0.s8 %v1231
  %v1233 = vlaneseq
  %v1234 = vshrl.u32 %v1233, 7
  %v1235 = vsub.s32 %v1232, %v1234
  %v1236 = vrot.slane %v1222, %v1235
  %v1237 = vld [vmem:[%s6] sm:$0xf]
  %v1238 = vlaneseq
  %v1239 = vshrl.u32 %v1238, 7
  %v1240 = vsub.s32 0, %v1239
  %v1241 = vrot.slane %v1229, %v1240
  %v1242 = vlaneseq
  %v1243 = vshrl.u32 %v1242, 7
  %v1244 = vsub.s32 0, %v1243
  %v1245 = vrot.slane %v1236, %v1244
  %v1248 = vmul.f32 %v1241, %v1237
  %v1249 = vmul.f32 %v1245, %v1237
  %vm1250 = vcmask 125952
  %v1251 = vsel %vm1250, %v1248, 0.0
  %1252 = vadd.xlane.f32.xlu0 %v1251
  %v1253 = vpop.xlane.xlu0 %1252
  %v1254 = vsel %vm1250, %v1249, 0.0
  %1255 = vadd.xlane.f32.xlu0 %v1254
  %v1256 = vpop.xlane.xlu0 %1255
  %s1257 = sld [smem:[#allocation3]]
  %v1258 = vstv %s1257
  %v1259 = vmul.f32 %v1253, %v1258
  %v1260 = vmul.f32 %v1256, %v1258
  %v1263 = vlaneseq
  %v1264 = vand.u32 %v1263, 127
  %v1265 = vlaneseq
  %v1266 = vshrl.u32 %v1265, 7
  %v1267 = vsub.s32 %v1264, %v1266
  %v1268 = vrot.slane %v1259, %v1267
  %v1269 = vlaneseq
  %v1270 = vshrl.u32 %v1269, 7
  %v1271 = vsub.s32 %v1264, %v1270
  %v1272 = vrot.slane %v1260, %v1271
  %v1273 = vsel %vm1138, %v1272, %v1268
  %vm1275 = vcmask 25600
  %v1276 = vsel %vm1275, %v1273, -inf
  %1277 = vmax.xlane.f32.xlu0 %v1276
  %v1278 = vpop.xlane.xlu0 %1277
  %v1280 = vlaneseq
  %v1281 = vshrl.u32 %v1280, 7
  %v1282 = vsub.s32 0, %v1281
  %v1283 = vrot.slane %v1278, %v1282
  %v1284 = vlaneseq
  %v1285 = vshrl.u32 %v1284, 7
  %v1286 = vsub.s32 1, %v1285
  %v1287 = vrot.slane %v1278, %v1286
  %v1290 = vsub.f32 %v1259, %v1283
  %v1291 = vsub.f32 %v1260, %v1287
  %v1292 = vmul.f32 %v1290, 1.442695
  %v1293 = vpow.pop %v1292
  %v1294 = vmul.f32 %v1291, 1.442695
  %v1295 = vpow.pop %v1294
  %1298 = vset.pattern.permute.xlu0 0
  %1299 = vperm.xlu0 %1298, %v1293
  %v1300 = vpop.permute.xlu0 %1299
  %1301 = vset.pattern.permute.xlu0 0
  %1302 = vperm.xlu0 %1301, %v1295
  %v1303 = vpop.permute.xlu0 %1302
  %v1304 = vlaneseq
  %v1305 = vshrl.u32 %v1304, 7
  %v1306 = vsub.s32 %v1264, %v1305
  %v1307 = vrot.slane %v1300, %v1306
  %v1308 = vlaneseq
  %v1309 = vshrl.u32 %v1308, 7
  %v1310 = vsub.s32 %v1264, %v1309
  %v1311 = vrot.slane %v1303, %v1310
  %v1312 = vsel %vm1138, %v1311, %v1307
  %v1314 = vsel %vm1275, %v1312, 0.0
  %1315 = vadd.xlane.f32.xlu0 %v1314
  %v1316 = vpop.xlane.xlu0 %1315
  %v1318 = vlaneseq
  %v1319 = vshrl.u32 %v1318, 7
  %v1320 = vsub.s32 0, %v1319
  %v1321 = vrot.slane %v1316, %v1320
  %v1322 = vlaneseq
  %v1323 = vshrl.u32 %v1322, 7
  %v1324 = vsub.s32 1, %v1323
  %v1325 = vrot.slane %v1316, %v1324
  %v1328 = vrcp.pop %v1321
  %v1329 = vmul.f32 %v1293, %v1328
  %v1330 = vrcp.pop %v1325
  %v1331 = vmul.f32 %v1295, %v1330
  %v1332 = vmul.f32 %v1253, %v1329
  %v1333 = vmul.f32 %v1256, %v1331
  %v1334 = vld [vmem:[%s7] sm:$0xf]
  %v1335 = vmul.f32 %v1253, %v1334
  %v1336 = vmul.f32 %v1256, %v1334
  %vm1337 = vcmask 27648
  %v1338 = vsel %vm1337, %v1335, 0.0
  %v1339 = vrot.slane %v1338, 4
  %v1340 = vadd.f32 %v1338, %v1339
  %v1341 = vrot.slane %v1340, 2
  %v1342 = vadd.f32 %v1340, %v1341
  %v1343 = vrot.slane %v1342, 1
  %v1344 = vadd.f32 %v1342, %v1343
  %v1345 = vsel %vm1337, %v1336, 0.0
  %v1346 = vrot.slane %v1345, 4
  %v1347 = vadd.f32 %v1345, %v1346
  %v1348 = vrot.slane %v1347, 2
  %v1349 = vadd.f32 %v1347, %v1348
  %v1350 = vrot.slane %v1349, 1
  %v1351 = vadd.f32 %v1349, %v1350
  %1355 = vbcast.lane.b32.xlu0 %v1344, 256
  %v1356 = vpop.permute.xlu0 %1355
  %1358 = vbcast.lane.b32.xlu0 %v1351, 256
  %v1359 = vpop.permute.xlu0 %1358
  %v1362 = vadd.f32 %v1332, %v1356
  %v1363 = vadd.f32 %v1333, %v1359
  %s1364 = sld [smem:[#allocation4]]
  %v1365 = vstv %s1364
  %v1366 = vmul.f32 %v1362, %v1365
  %v1367 = vmul.f32 %v1363, %v1365
  %v1368 = vmax.f32 %v1366, 0.0
  %v1369 = vmax.f32 %v1367, 0.0
  %v1370 = vld [vmem:[%s8] sm:$0xf]
  %1372 = vset.pattern.permute.xlu0 0
  %1373 = vperm.xlu0 %1372, %v1368
  %v1374 = vpop.permute.xlu0 %1373
  %1377 = vset.pattern.permute.xlu0 0
  %1378 = vperm.xlu0 %1377, %v1369
  %v1379 = vpop.permute.xlu0 %1378
  %v1381 = vmul.f32 %v1374, %v1370
  %v1382 = vmul.f32 %v1379, %v1370
  %v1383 = vsel %vm1250, %v1381, 0.0
  %v1384 = vrot.slane %v1383, 4
  %v1385 = vadd.f32 %v1383, %v1384
  %v1386 = vrot.slane %v1385, 2
  %v1387 = vadd.f32 %v1385, %v1386
  %v1388 = vrot.slane %v1387, 1
  %v1389 = vadd.f32 %v1387, %v1388
  %v1390 = vsel %vm1250, %v1382, 0.0
  %v1391 = vrot.slane %v1390, 4
  %v1392 = vadd.f32 %v1390, %v1391
  %v1393 = vrot.slane %v1392, 2
  %v1394 = vadd.f32 %v1392, %v1393
  %v1395 = vrot.slane %v1394, 1
  %v1396 = vadd.f32 %v1394, %v1395
  %v1397 = vxor.u32 %v1389, 2147483648
  %v1398 = vxor.u32 %v1396, 2147483648
  %v1399 = vmul.f32 %v1397, 1.442695
  %v1400 = vpow.pop %v1399
  %v1401 = vmul.f32 %v1398, 1.442695
  %v1402 = vpow.pop %v1401
  %v1403 = vadd.f32 %v1400, 1.0
  %v1404 = vadd.f32 %v1402, 1.0
  %v1405 = vrcp.pop %v1403
  %v1406 = vmul.f32 1.0, %v1405
  %v1407 = vrcp.pop %v1404
  %v1408 = vmul.f32 1.0, %v1407
  %v1411 = vsel %vm1138, %v1408, %v1406
  %v1412 = vsel %vm877, %v1411, 0
  %1414 = vmatprep.subr.mxu0 0.0
  %1415 = vmatpush1.msra.mxu0 0.0
  %1416 = vmatprep.subr.mxu0 0.0
  %1417 = vmatpush1.msra.mxu0 0.0
  %1418 = vmatprep.subr.mxu0 0.0
  %1419 = vmatpush1.msra.mxu0 0.0
  %1420 = vmatprep.subr.mxu0 0.0
  %1421 = vmatpush1.msra.mxu0 0.0
  %1422 = vmatprep.subr.mxu0 0.0
  %1423 = vmatpush1.msra.mxu0 0.0
  %1424 = vmatprep.subr.mxu0 0.0
  %1425 = vmatpush1.msra.mxu0 0.0
  %1426 = vmatprep.subr.mxu0 0.0
  %1427 = vmatpush1.msra.mxu0 0.0
  %1428 = vmatprep.subr.mxu0 0.0
  %1429 = vmatpush1.msra.mxu0 0.0
  %1430 = vmatprep.subr.mxu0 0.0
  %1431 = vmatpush1.msra.mxu0 0.0
  %1432 = vmatprep.subr.mxu0 0.0
  %1433 = vmatpush1.msra.mxu0 0.0
  %1434 = vmatprep.subr.mxu0 0.0
  %1435 = vmatpush1.msra.mxu0 0.0
  %1436 = vmatprep.subr.mxu0 0.0
  %1437 = vmatpush1.msra.mxu0 0.0
  %1438 = vmatprep.subr.mxu0 0.0
  %1439 = vmatpush1.msra.mxu0 0.0
  %1440 = vmatprep.subr.mxu0 0.0
  %1441 = vmatpush1.msra.mxu0 0.0
  %1442 = vmatprep.subr.mxu0 %v876
  %1443 = vmatpush1.msra.mxu0 %v875
  %1444 = vmatprep.subr.mxu0 %v874
  %1445 = vmatpush1.msra.mxu0 %v873
  %1446 = vmatprep.subr.mxu0 0.0
  %1447 = vmatpush2.msra.mxu0 0.0
  %1448 = vmatprep.subr.mxu0 0.0
  %1449 = vmatpush2.msra.mxu0 0.0
  %1450 = vmatprep.subr.mxu0 0.0
  %1451 = vmatpush2.msra.mxu0 0.0
  %1452 = vmatprep.subr.mxu0 0.0
  %1453 = vmatpush2.msra.mxu0 0.0
  %1454 = vmatprep.subr.mxu0 0.0
  %1455 = vmatpush2.msra.mxu0 0.0
  %1456 = vmatprep.subr.mxu0 0.0
  %1457 = vmatpush2.msra.mxu0 0.0
  %1458 = vmatprep.subr.mxu0 0.0
  %1459 = vmatpush2.msra.mxu0 0.0
  %1460 = vmatprep.subr.mxu0 0.0
  %1461 = vmatpush2.msra.mxu0 0.0
  %1462 = vmatprep.subr.mxu0 0.0
  %1463 = vmatpush2.msra.mxu0 0.0
  %1464 = vmatprep.subr.mxu0 0.0
  %1465 = vmatpush2.msra.mxu0 0.0
  %1466 = vmatprep.subr.mxu0 0.0
  %1467 = vmatpush2.msra.mxu0 0.0
  %1468 = vmatprep.subr.mxu0 0.0
  %1469 = vmatpush2.msra.mxu0 0.0
  %1470 = vmatprep.subr.mxu0 0.0
  %1471 = vmatpush2.msra.mxu0 0.0
  %1472 = vmatprep.subr.mxu0 0.0
  %1473 = vmatpush2.msra.mxu0 0.0
  %1474 = vmatprep.subr.mxu0 0.0
  %1475 = vmatpush2.msra.mxu0 0.0
  %1476 = vmatprep.subr.mxu0 0.0
  %1477 = vmatpush2.msra.mxu0 0.0
  %1478 = vmatprep.mubr.f32.mxu0 0.0
  %1479 = vmatmul.mubr.f32.gmra.mxu0 %v1412
  %v1480 = vpop.f32.mrf.mxu0
  %v1481 = vadd.f32 0.0, %v1480
  %v1482 = vpop.f32.mrf.mxu0
  %v1483 = vadd.f32 0.0, %v1482
  %1484 = vdwg.mxu0
  %v1487 = vcombine.low %v1481, %v1483
  %v1489 = vunpack.c.l.s4 1966171168
  %v1490 = vunpack.c.0.s8 %v1489
  %v1491 = vlaneseq
  %v1492 = vshrl.u32 %v1491, 7
  %v1493 = vsub.s32 %v1490, %v1492
  %v1494 = vrot.slane %v1487, %v1493
  %v1495 = vcombine.high %v1494, %v1494
  %v1497 = vunpack.c.l.s4 1966171168
  %v1498 = vunpack.c.0.s8 %v1497
  %v1499 = vlaneseq
  %v1500 = vshrl.u32 %v1499, 7
  %v1501 = vsub.s32 %v1498, %v1500
  %v1502 = vrot.slane %v1494, %v1501
  %v1504 = vunpack.c.l.s4 1966171168
  %v1505 = vunpack.c.0.s8 %v1504
  %v1506 = vlaneseq
  %v1507 = vshrl.u32 %v1506, 7
  %v1508 = vsub.s32 %v1505, %v1507
  %v1509 = vrot.slane %v1495, %v1508
  %v1510 = vlaneseq
  %v1511 = vshrl.u32 %v1510, 7
  %v1512 = vsub.s32 0, %v1511
  %v1513 = vrot.slane %v1502, %v1512
  %v1514 = vlaneseq
  %v1515 = vshrl.u32 %v1514, 7
  %v1516 = vsub.s32 1, %v1515
  %v1517 = vrot.slane %v1502, %v1516
  %v1518 = vlaneseq
  %v1519 = vshrl.u32 %v1518, 7
  %v1520 = vsub.s32 0, %v1519
  %v1521 = vrot.slane %v1509, %v1520
  %v1522 = vlaneseq
  %v1523 = vshrl.u32 %v1522, 7
  %v1524 = vsub.s32 1, %v1523
  %v1525 = vrot.slane %v1509, %v1524
  %v1530 = vmul.f32 %v40, %v1513
  %v1531 = vmul.f32 %v41, %v1517
  %v1532 = vmul.f32 %v42, %v1513
  %v1533 = vmul.f32 %v43, %v1517
  %v1534 = vmul.f32 %v44, %v1521
  %v1535 = vmul.f32 %v45, %v1525
  %v1536 = vmul.f32 %v46, %v1521
  %v1537 = vmul.f32 %v47, %v1525
  %v1538 = vmul.f32 %v1530, %v1091
  %v1539 = vmul.f32 %v1531, %v1093
  %v1540 = vmul.f32 %v1532, %v1095
  %v1541 = vmul.f32 %v1533, %v1097
  %v1542 = vmul.f32 %v1534, %v1099
  %v1543 = vmul.f32 %v1535, %v1101
  %v1544 = vmul.f32 %v1536, %v1103
  %v1545 = vmul.f32 %v1537, %v1105
  %1546 = vst [vmem:[%s11] sm:$0xff] %v1538
  %1547 = vst [vmem:[%s11 + $0x8] sm:$0xff] %v1539
  %1548 = vst [vmem:[%s11 + $0x10] sm:$0xff] %v1540
  %1549 = vst [vmem:[%s11 + $0x18] sm:$0xff] %v1541
  %1550 = vst [vmem:[%s11 + $0x20] sm:$0xff] %v1542
  %1551 = vst [vmem:[%s11 + $0x28] sm:$0xff] %v1543
  %1552 = vst [vmem:[%s11 + $0x30] sm:$0xff] %v1544
  %1553 = vst [vmem:[%s11 + $0x38] sm:$0xff] %v1545
  // Predicated region
  $region46: #{aff_forward.1} parent=0 // pred_check
    _
  $region47: #{aff_forward.1} parent=0 // pred_check_branch
    %1555 = sbr.rel (0) target = $region49
  $region48: #{aff_forward.1} parent=0 // pred_region
    _
  $region49: #{aff_forward.1} parent=0 // pred_fallthru
    _
  // Predicated region
  $region50: #{aff_forward.1} parent=0 // pred_check
    _
  $region51: #{aff_forward.1} parent=0 // pred_check_branch
    %1557 = sbr.rel (0) target = $region53
  $region52: #{aff_forward.1} parent=0 // pred_region
    _
  $region53: #{aff_forward.1} parent=0 // pred_fallthru
    _

</llo_original>
